<compile_context>
chip_gen: v5e
topology: v5e:2x2
jax: 0.10.0
libtpu: 0.0.40
codegen_flags: <defaults>
</compile_context>

<pallas_src>
import functools

import jax
import jax.numpy as jnp
from jax.experimental import pallas as pl
from jax.experimental.pallas import tpu as pltpu

VOCAB = 100    # input_size
HIDDEN = 32    # hidden_size
OUTPUT = 64    # output_size

_LANE = 128    # TPU lane width; feature dims are padded to this
_SUB = 8       # sublane quantum; the sequence dim is padded to this


def _round_up(x, m):
    return ((x + m - 1) // m) * m


def _rnn_seq_kernel(ids_ref, emb_ref, w_ih_ref, b_ih_ref, w_hh_ref, b_hh_ref,
                    w_lin_ref, b_lin_ref, h0_ref,
                    out_ref, h_out_ref,
                    gi_scr, hs_scr,
                    *, seq_len, unroll):
    """Single invocation (grid=(1,)) running the whole GRU sequence.

    Layout: hidden/vocab/output dims are zero-padded to 128 lanes; gate
    weights are fused into (HP, 3*128) with gate g in lane group
    [g*128, g*128+H), gate order [r|z|n].  Padded lanes of h stay exactly 0
    through the recurrence, so no masking is needed.
    """
    tp, hp = hs_scr.shape            # padded seq length, padded hidden (128)
    vp = emb_ref.shape[0]            # padded vocab (128)

    # ---- Prologue: one-hot MXU embedding gather + batched input projection.
    ids = ids_ref[...]                                            # (TP, 1) i32
    onehot = (jax.lax.broadcasted_iota(jnp.int32, (tp, vp), 1) == ids
              ).astype(jnp.float32)                               # (TP, VP)
    x_all = jnp.dot(onehot, emb_ref[...],
                    preferred_element_type=jnp.float32)           # (TP, HP)

    # Fused input projection for the whole sequence; gates land lane-aligned
    # in 128-lane groups [r|z|n].  One contiguous row per token.
    gi_scr[...] = (jnp.dot(x_all, w_ih_ref[...],
                           preferred_element_type=jnp.float32) + b_ih_ref[...])

    if tp > seq_len:   # padded rows of hs feed the epilogue matmul -> zero them
        hs_scr[...] = jnp.zeros_like(hs_scr)

    # Hoist the resident recurrent weights out of the loop.
    w_hh = w_hh_ref[...]                                          # (HP, 3*HP)
    b_hh = b_hh_ref[...]                                          # (1, 3*HP)

    # ---- Recurrence: h carried in vregs; one fused MXU matmul per step.
    def step(t, h):
        gh = jnp.dot(h, w_hh, preferred_element_type=jnp.float32) + b_hh
        gi = gi_scr[pl.ds(t, 1), :]                               # (1, 3*HP)
        # 128-lane-aligned gate split -> vreg selects, no cross-lane work.
        r = jax.nn.sigmoid(gi[:, 0:hp] + gh[:, 0:hp])
        z = jax.nn.sigmoid(gi[:, hp:2 * hp] + gh[:, hp:2 * hp])
        # torch.nn.GRU: n = tanh(W_in x + b_in + r * (W_hn h + b_hn))
        n = jnp.tanh(gi[:, 2 * hp:3 * hp] + r * gh[:, 2 * hp:3 * hp])
        h_new = (1.0 - z) * n + z * h
        hs_scr[pl.ds(t, 1), :] = h_new                            # for epilogue
        return h_new

    h_final = jax.lax.fori_loop(0, seq_len, step, h0_ref[...], unroll=unroll)

    # ---- Epilogue: one batched Linear matmul + one lane-dense block store.
    out_ref[...] = (jnp.dot(hs_scr[...], w_lin_ref[...],
                            preferred_element_type=jnp.float32)
                    + b_lin_ref[...])
    h_out_ref[...] = h_final


def _pad2d(x, rows, cols):
    x = jnp.asarray(x, jnp.float32)
    return jnp.zeros((rows, cols), jnp.float32).at[:x.shape[0], :x.shape[1]].set(x)


@jax.jit
def rnn_forward_sequence(token_ids, hidden0, params):
    """Runs the module's forward over a whole token sequence in one kernel.

    Equivalent to looping `output, hidden = RNN.forward(tok, hidden)` over
    `token_ids` and stacking outputs.  Returns (outputs (T,1,O), hidden (1,1,H)).
    """
    emb = params["embedding"]
    V, H = emb.shape
    O = params["w_lin"].shape[1]
    T = token_ids.shape[0]

    HP = _round_up(H, _LANE)              # 128
    VP = _round_up(V, _LANE)              # 128
    OP = _round_up(O, _LANE)              # 128 (lane-dense output)
    TP = _round_up(max(T, _SUB), _SUB)    # sublane-aligned sequence length

    # nn.Embedding would raise on out-of-range ids; we clamp instead (documented).
    ids = jnp.clip(token_ids.astype(jnp.int32), 0, V - 1)
    ids_col = jnp.zeros((TP, 1), jnp.int32).at[:T, 0].set(ids)

    emb_p = _pad2d(emb, VP, HP)

    # Fuse + lane-pad gate weights: gate g (order [r|z|n]) occupies lanes
    # [g*128, g*128+H).  Padding columns/rows are zero.
    def fuse_w(w3):
        out = jnp.zeros((HP, 3 * HP), jnp.float32)
        for g in range(3):
            out = out.at[:H, g * HP:g * HP + H].set(w3[g].astype(jnp.float32))
        return out

    def fuse_b(b3):
        out = jnp.zeros((1, 3 * HP), jnp.float32)
        for g in range(3):
            out = out.at[:, g * HP:g * HP + H].set(
                b3[g].reshape(1, H).astype(jnp.float32))
        return out

    w_ih_f = fuse_w(params["w_ih"])
    b_ih_f = fuse_b(params["b_ih"])
    w_hh_f = fuse_w(params["w_hh"])
    b_hh_f = fuse_b(params["b_hh"])
    w_lin_p = _pad2d(params["w_lin"], HP, OP)
    b_lin_p = _pad2d(params["b_lin"].reshape(1, O), 1, OP)
    h0_p = _pad2d(hidden0.reshape(1, H), 1, HP)

    const2 = lambda i: (0, 0)

    grid_spec = pltpu.PrefetchScalarGridSpec(
        num_scalar_prefetch=0,
        grid=(1,),                                  # single invocation
        in_specs=[
            pl.BlockSpec((TP, 1), const2),          # token ids (column)
            pl.BlockSpec((VP, HP), const2),         # embedding table (padded)
            pl.BlockSpec((HP, 3 * HP), const2),     # fused W_ih  [r|z|n]
            pl.BlockSpec((1, 3 * HP), const2),      # fused b_ih
            pl.BlockSpec((HP, 3 * HP), const2),     # fused W_hh
            pl.BlockSpec((1, 3 * HP), const2),      # fused b_hh
            pl.BlockSpec((HP, OP), const2),         # W_lin (padded)
            pl.BlockSpec((1, OP), const2),          # b_lin (padded)
            pl.BlockSpec((1, HP), const2),          # h0 (padded)
        ],
        out_specs=[
            pl.BlockSpec((TP, OP), const2),         # per-token outputs (lane-dense)
            pl.BlockSpec((1, HP), const2),          # final hidden (padded)
        ],
        scratch_shapes=[
            pltpu.VMEM((TP, 3 * HP), jnp.float32),  # precomputed input projections
            pltpu.VMEM((TP, HP), jnp.float32),      # per-step hidden states
        ],
    )

    flops = (2 * TP * VP * HP            # one-hot embedding gather
             + 2 * TP * HP * 3 * HP      # batched input projection
             + T * 2 * HP * 3 * HP       # recurrent projection per step
             + 2 * TP * HP * OP)         # batched linear head
    transcendentals = 3 * HP * T
    bytes_accessed = 4 * (TP + VP * HP + 2 * (HP * 3 * HP + 3 * HP)
                          + HP * OP + OP + HP + TP * OP + HP)
    cost = pl.CostEstimate(flops=flops, transcendentals=transcendentals,
                           bytes_accessed=bytes_accessed)

    kernel = functools.partial(_rnn_seq_kernel, seq_len=T, unroll=(T <= 64))

    out_pad, h_pad = pl.pallas_call(
        kernel,
        grid_spec=grid_spec,
        out_shape=(jax.ShapeDtypeStruct((TP, OP), jnp.float32),
                   jax.ShapeDtypeStruct((1, HP), jnp.float32)),
        compiler_params=pltpu.CompilerParams(
            dimension_semantics=("arbitrary",)),
        cost_estimate=cost,
    )(ids_col, emb_p, w_ih_f, b_ih_f, w_hh_f, b_hh_f, w_lin_p, b_lin_p, h0_p)

    # PyTorch shapes: outputs (T, 1, O), hidden (1, 1, H).
    return out_pad[:T, :O].reshape(T, 1, O), h_pad[:, :H].reshape(1, 1, H)


def rnn_forward(token_id, hidden, params):
    """Exactly mirrors RNN.forward(input, hidden) for a single token."""
    out, h = rnn_forward_sequence(jnp.reshape(token_id, (1,)), hidden, params)
    return out.reshape(1, 1, -1), h


def init_params(key, vocab, hidden, output):
    """Deterministic parameter init matching the module's shapes.
    GRU weights are stored per-gate, transposed: w[g] is (in, out), gate order
    [r|z|n] (== torch weight_*_l0[g*H:(g+1)*H, :].T)."""
    ks = jax.random.split(key, 7)
    s = 1.0 / (hidden ** 0.5)
    u = lambda k, shape: jax.random.uniform(k, shape, jnp.float32, -s, s)
    return {
        "embedding": jax.random.normal(ks[0], (vocab, hidden), jnp.float32),
        "w_ih": u(ks[1], (3, hidden, hidden)),
        "b_ih": u(ks[2], (3, 1, hidden)),
        "w_hh": u(ks[3], (3, hidden, hidden)),
        "b_hh": u(ks[4], (3, 1, hidden)),
        "w_lin": u(ks[5], (hidden, output)),
        "b_lin": u(ks[6], (1, output)),
    }


def _reference_forward(token_ids, hidden0, p):
    """Pure-JAX per-token reference of the same math (correctness check)."""
    H = p["embedding"].shape[1]
    h = hidden0.reshape(1, H)
    outs = []
    for tok in token_ids:
        x = p["embedding"][tok].reshape(1, H)
        gi = [x @ p["w_ih"][g] + p["b_ih"][g] for g in range(3)]
        gh = [h @ p["w_hh"][g] + p["b_hh"][g] for g in range(3)]
        r = jax.nn.sigmoid(gi[0] + gh[0])
        z = jax.nn.sigmoid(gi[1] + gh[1])
        n = jnp.tanh(gi[2] + r * gh[2])
        h = (1.0 - z) * n + z * h
        outs.append(h @ p["w_lin"] + p["b_lin"])
    out = jnp.stack(outs).reshape(len(token_ids), 1, -1)
    return out, h.reshape(1, 1, H)


if __name__ == "__main__":
    key = jax.random.PRNGKey(0)
    params = init_params(key, VOCAB, HIDDEN, OUTPUT)

    T = 8
    token_ids = jax.random.randint(jax.random.PRNGKey(1), (T,), 0, VOCAB,
                                   dtype=jnp.int32)
    hidden0 = jnp.zeros((1, 1, HIDDEN), jnp.float32)          # initHidden()

    # Whole-sequence kernel (one pallas_call, one invocation).
    out_seq, h_T = rnn_forward_sequence(token_ids, hidden0, params)
    jax.block_until_ready((out_seq, h_T))

    ref_out, ref_h = _reference_forward(token_ids, hidden0, params)
    assert out_seq.shape == (T, 1, OUTPUT) and h_T.shape == (1, 1, HIDDEN)
    assert jnp.allclose(out_seq, ref_out, atol=5e-4, rtol=5e-4)
    assert jnp.allclose(h_T, ref_h, atol=5e-4, rtol=5e-4)

    # Single-token API, matching the PyTorch module's forward() exactly.
    out1, h1 = rnn_forward(token_ids[0], hidden0, params)
    jax.block_until_ready((out1, h1))
    ref1_out, ref1_h = _reference_forward(token_ids[:1], hidden0, params)
    assert out1.shape == (1, 1, OUTPUT) and h1.shape == (1, 1, HIDDEN)
    assert jnp.allclose(out1, ref1_out.reshape(1, 1, -1), atol=5e-4, rtol=5e-4)
    assert jnp.allclose(h1, ref1_h, atol=5e-4, rtol=5e-4)

    print("KERNEL_OK")
</pallas_src>

<mosaic_0001>
module attributes {stable_mosaic.version = 11 : i64} {
  func.func @_rnn_seq_kernel(%arg0: i32, %arg1: memref<8x1xi32, #tpu.memory_space<vmem>>, %arg2: memref<128x128xf32, #tpu.memory_space<vmem>>, %arg3: memref<128x384xf32, #tpu.memory_space<vmem>>, %arg4: memref<1x384xf32, #tpu.memory_space<vmem>>, %arg5: memref<128x384xf32, #tpu.memory_space<vmem>>, %arg6: memref<1x384xf32, #tpu.memory_space<vmem>>, %arg7: memref<128x128xf32, #tpu.memory_space<vmem>>, %arg8: memref<1x128xf32, #tpu.memory_space<vmem>>, %arg9: memref<1x128xf32, #tpu.memory_space<vmem>>, %arg10: memref<8x128xf32, #tpu.memory_space<vmem>>, %arg11: memref<1x128xf32, #tpu.memory_space<vmem>>, %arg12: memref<8x384xf32, #tpu.memory_space<vmem>>, %arg13: memref<8x128xf32, #tpu.memory_space<vmem>>) attributes {dimension_semantics = [#tpu.dimension_semantics<arbitrary>], iteration_bounds = array<i64: 1>, scalar_prefetch = 0 : i64, scratch_operands = 2 : i64, tpu.core_type = #tpu.core_type<tc>, window_params = [{pipeline_mode = #tpu.pipeline_mode<synchronous>, transform_indices = @transform_0, window_bounds = array<i64: 8, 1>}, {pipeline_mode = #tpu.pipeline_mode<synchronous>, transform_indices = @transform_1, window_bounds = array<i64: 128, 128>}, {pipeline_mode = #tpu.pipeline_mode<synchronous>, transform_indices = @transform_2, window_bounds = array<i64: 128, 384>}, {pipeline_mode = #tpu.pipeline_mode<synchronous>, transform_indices = @transform_3, window_bounds = array<i64: 1, 384>}, {pipeline_mode = #tpu.pipeline_mode<synchronous>, transform_indices = @transform_4, window_bounds = array<i64: 128, 384>}, {pipeline_mode = #tpu.pipeline_mode<synchronous>, transform_indices = @transform_5, window_bounds = array<i64: 1, 384>}, {pipeline_mode = #tpu.pipeline_mode<synchronous>, transform_indices = @transform_6, window_bounds = array<i64: 128, 128>}, {pipeline_mode = #tpu.pipeline_mode<synchronous>, transform_indices = @transform_7, window_bounds = array<i64: 1, 128>}, {pipeline_mode = #tpu.pipeline_mode<synchronous>, transform_indices = @transform_8, window_bounds = array<i64: 1, 128>}, {pipeline_mode = #tpu.pipeline_mode<synchronous>, transform_indices = @transform_9, window_bounds = array<i64: 8, 128>}, {pipeline_mode = #tpu.pipeline_mode<synchronous>, transform_indices = @transform_10, window_bounds = array<i64: 1, 128>}]} {
    %c0 = arith.constant 0 : index
    %c0_0 = arith.constant 0 : index
    %0 = vector.load %arg1[%c0, %c0_0] : memref<8x1xi32, #tpu.memory_space<vmem>>, vector<8x1xi32>
    %1 = tpu.iota {dimensions = array<i32: 1>} : vector<8x128xi32>
    %2 = vector.broadcast %0 : vector<8x1xi32> to vector<8x128xi32>
    %3 = arith.cmpi eq, %1, %2 : vector<8x128xi32>
    %4 = arith.extui %3 : vector<8x128xi1> to vector<8x128xi32>
    %5 = arith.sitofp %4 : vector<8x128xi32> to vector<8x128xf32>
    %c0_1 = arith.constant 0 : index
    %c0_2 = arith.constant 0 : index
    %6 = vector.load %arg2[%c0_1, %c0_2] : memref<128x128xf32, #tpu.memory_space<vmem>>, vector<128x128xf32>
    %cst = arith.constant dense<0.000000e+00> : vector<8x128xf32>
    %7 = tpu.matmul %5, %6, %cst {dimension_numbers = #tpu.dot_dimension_numbers<[1], [0], [0], [1], [0, 0, 1, 1], [], []>} : vector<8x128xf32>, vector<128x128xf32>, vector<8x128xf32> -> vector<8x128xf32>
    %c0_3 = arith.constant 0 : index
    %c0_4 = arith.constant 0 : index
    %8 = vector.load %arg3[%c0_3, %c0_4] : memref<128x384xf32, #tpu.memory_space<vmem>>, vector<128x384xf32>
    %cst_5 = arith.constant dense<0.000000e+00> : vector<8x384xf32>
    %9 = tpu.matmul %7, %8, %cst_5 {dimension_numbers = #tpu.dot_dimension_numbers<[1], [0], [0], [1], [0, 0, 1, 1], [], []>} : vector<8x128xf32>, vector<128x384xf32>, vector<8x384xf32> -> vector<8x384xf32>
    %c0_6 = arith.constant 0 : index
    %c0_7 = arith.constant 0 : index
    %10 = vector.load %arg4[%c0_6, %c0_7] : memref<1x384xf32, #tpu.memory_space<vmem>>, vector<1x384xf32>
    %11 = vector.broadcast %10 : vector<1x384xf32> to vector<8x384xf32>
    %12 = arith.addf %9, %11 : vector<8x384xf32>
    %c0_8 = arith.constant 0 : index
    %c0_9 = arith.constant 0 : index
    %13 = vector.load %arg12[%c0_8, %c0_9] : memref<8x384xf32, #tpu.memory_space<vmem>>, vector<8x384xf32>
    tpu.vector_store %arg12[%c0_8, %c0_9], %12 {strides = array<i32>} : memref<8x384xf32, #tpu.memory_space<vmem>>, vector<8x384xf32>,
    %c0_10 = arith.constant 0 : index
    %c0_11 = arith.constant 0 : index
    %14 = vector.load %arg5[%c0_10, %c0_11] : memref<128x384xf32, #tpu.memory_space<vmem>>, vector<128x384xf32>
    %c0_12 = arith.constant 0 : index
    %c0_13 = arith.constant 0 : index
    %15 = vector.load %arg6[%c0_12, %c0_13] : memref<1x384xf32, #tpu.memory_space<vmem>>, vector<1x384xf32>
    %c0_14 = arith.constant 0 : index
    %c0_15 = arith.constant 0 : index
    %16 = vector.load %arg9[%c0_14, %c0_15] : memref<1x128xf32, #tpu.memory_space<vmem>>, vector<1x128xf32>
    %c0_i32 = arith.constant 0 : i32
    %cst_16 = arith.constant dense<0.000000e+00> : vector<1x384xf32>
    %17 = tpu.matmul %16, %14, %cst_16 {dimension_numbers = #tpu.dot_dimension_numbers<[1], [0], [0], [1], [0, 0, 1, 1], [], []>} : vector<1x128xf32>, vector<128x384xf32>, vector<1x384xf32> -> vector<1x384xf32>
    %18 = arith.addf %17, %15 : vector<1x384xf32>
    %19 = arith.index_cast %c0_i32 : i32 to index
    %c0_17 = arith.constant 0 : index
    %20 = vector.load %arg12[%19, %c0_17] : memref<8x384xf32, #tpu.memory_space<vmem>>, vector<1x384xf32>
    %21 = vector.extract_strided_slice %20 {offsets = [0, 0], sizes = [1, 128], strides = [1, 1]} : vector<1x384xf32> to vector<1x128xf32>
    %22 = vector.extract_strided_slice %18 {offsets = [0, 0], sizes = [1, 128], strides = [1, 1]} : vector<1x384xf32> to vector<1x128xf32>
    %23 = arith.addf %21, %22 : vector<1x128xf32>
    %24 = arith.negf %23 : vector<1x128xf32>
    %25 = math.exp %24 : vector<1x128xf32>
    %cst_18 = arith.constant 1.000000e+00 : f32
    %26 = vector.broadcast %cst_18 : f32 to vector<1x128xf32>
    %27 = arith.addf %26, %25 : vector<1x128xf32>
    %28 = arith.divf %26, %27 : vector<1x128xf32>
    %29 = vector.extract_strided_slice %20 {offsets = [0, 128], sizes = [1, 128], strides = [1, 1]} : vector<1x384xf32> to vector<1x128xf32>
    %30 = vector.extract_strided_slice %18 {offsets = [0, 128], sizes = [1, 128], strides = [1, 1]} : vector<1x384xf32> to vector<1x128xf32>
    %31 = arith.addf %29, %30 : vector<1x128xf32>
    %32 = arith.negf %31 : vector<1x128xf32>
    %33 = math.exp %32 : vector<1x128xf32>
    %cst_19 = arith.constant 1.000000e+00 : f32
    %34 = vector.broadcast %cst_19 : f32 to vector<1x128xf32>
    %35 = arith.addf %34, %33 : vector<1x128xf32>
    %36 = arith.divf %34, %35 : vector<1x128xf32>
    %37 = vector.extract_strided_slice %20 {offsets = [0, 256], sizes = [1, 128], strides = [1, 1]} : vector<1x384xf32> to vector<1x128xf32>
    %38 = vector.extract_strided_slice %18 {offsets = [0, 256], sizes = [1, 128], strides = [1, 1]} : vector<1x384xf32> to vector<1x128xf32>
    %39 = arith.mulf %28, %38 : vector<1x128xf32>
    %40 = arith.addf %37, %39 : vector<1x128xf32>
    %41 = math.tanh %40 : vector<1x128xf32>
    %cst_20 = arith.constant 1.000000e+00 : f32
    %42 = vector.broadcast %cst_20 : f32 to vector<1x128xf32>
    %43 = arith.subf %42, %36 : vector<1x128xf32>
    %44 = arith.mulf %43, %41 : vector<1x128xf32>
    %45 = arith.mulf %36, %16 : vector<1x128xf32>
    %46 = arith.addf %44, %45 : vector<1x128xf32>
    %47 = arith.index_cast %c0_i32 : i32 to index
    %c0_21 = arith.constant 0 : index
    %48 = vector.load %arg13[%47, %c0_21] : memref<8x128xf32, #tpu.memory_space<vmem>>, vector<1x128xf32>
    tpu.vector_store %arg13[%47, %c0_21], %46 {strides = array<i32>} : memref<8x128xf32, #tpu.memory_space<vmem>>, vector<1x128xf32>,
    %c1_i32 = arith.constant 1 : i32
    %cst_22 = arith.constant dense<0.000000e+00> : vector<1x384xf32>
    %49 = tpu.matmul %46, %14, %cst_22 {dimension_numbers = #tpu.dot_dimension_numbers<[1], [0], [0], [1], [0, 0, 1, 1], [], []>} : vector<1x128xf32>, vector<128x384xf32>, vector<1x384xf32> -> vector<1x384xf32>
    %50 = arith.addf %49, %15 : vector<1x384xf32>
    %51 = arith.index_cast %c1_i32 : i32 to index
    %c0_23 = arith.constant 0 : index
    %52 = vector.load %arg12[%51, %c0_23] : memref<8x384xf32, #tpu.memory_space<vmem>>, vector<1x384xf32>
    %53 = vector.extract_strided_slice %52 {offsets = [0, 0], sizes = [1, 128], strides = [1, 1]} : vector<1x384xf32> to vector<1x128xf32>
    %54 = vector.extract_strided_slice %50 {offsets = [0, 0], sizes = [1, 128], strides = [1, 1]} : vector<1x384xf32> to vector<1x128xf32>
    %55 = arith.addf %53, %54 : vector<1x128xf32>
    %56 = arith.negf %55 : vector<1x128xf32>
    %57 = math.exp %56 : vector<1x128xf32>
    %cst_24 = arith.constant 1.000000e+00 : f32
    %58 = vector.broadcast %cst_24 : f32 to vector<1x128xf32>
    %59 = arith.addf %58, %57 : vector<1x128xf32>
    %60 = arith.divf %58, %59 : vector<1x128xf32>
    %61 = vector.extract_strided_slice %52 {offsets = [0, 128], sizes = [1, 128], strides = [1, 1]} : vector<1x384xf32> to vector<1x128xf32>
    %62 = vector.extract_strided_slice %50 {offsets = [0, 128], sizes = [1, 128], strides = [1, 1]} : vector<1x384xf32> to vector<1x128xf32>
    %63 = arith.addf %61, %62 : vector<1x128xf32>
    %64 = arith.negf %63 : vector<1x128xf32>
    %65 = math.exp %64 : vector<1x128xf32>
    %cst_25 = arith.constant 1.000000e+00 : f32
    %66 = vector.broadcast %cst_25 : f32 to vector<1x128xf32>
    %67 = arith.addf %66, %65 : vector<1x128xf32>
    %68 = arith.divf %66, %67 : vector<1x128xf32>
    %69 = vector.extract_strided_slice %52 {offsets = [0, 256], sizes = [1, 128], strides = [1, 1]} : vector<1x384xf32> to vector<1x128xf32>
    %70 = vector.extract_strided_slice %50 {offsets = [0, 256], sizes = [1, 128], strides = [1, 1]} : vector<1x384xf32> to vector<1x128xf32>
    %71 = arith.mulf %60, %70 : vector<1x128xf32>
    %72 = arith.addf %69, %71 : vector<1x128xf32>
    %73 = math.tanh %72 : vector<1x128xf32>
    %cst_26 = arith.constant 1.000000e+00 : f32
    %74 = vector.broadcast %cst_26 : f32 to vector<1x128xf32>
    %75 = arith.subf %74, %68 : vector<1x128xf32>
    %76 = arith.mulf %75, %73 : vector<1x128xf32>
    %77 = arith.mulf %68, %46 : vector<1x128xf32>
    %78 = arith.addf %76, %77 : vector<1x128xf32>
    %79 = arith.index_cast %c1_i32 : i32 to index
    %c0_27 = arith.constant 0 : index
    %80 = vector.load %arg13[%79, %c0_27] : memref<8x128xf32, #tpu.memory_space<vmem>>, vector<1x128xf32>
    tpu.vector_store %arg13[%79, %c0_27], %78 {strides = array<i32>} : memref<8x128xf32, #tpu.memory_space<vmem>>, vector<1x128xf32>,
    %c2_i32 = arith.constant 2 : i32
    %cst_28 = arith.constant dense<0.000000e+00> : vector<1x384xf32>
    %81 = tpu.matmul %78, %14, %cst_28 {dimension_numbers = #tpu.dot_dimension_numbers<[1], [0], [0], [1], [0, 0, 1, 1], [], []>} : vector<1x128xf32>, vector<128x384xf32>, vector<1x384xf32> -> vector<1x384xf32>
    %82 = arith.addf %81, %15 : vector<1x384xf32>
    %83 = arith.index_cast %c2_i32 : i32 to index
    %c0_29 = arith.constant 0 : index
    %84 = vector.load %arg12[%83, %c0_29] : memref<8x384xf32, #tpu.memory_space<vmem>>, vector<1x384xf32>
    %85 = vector.extract_strided_slice %84 {offsets = [0, 0], sizes = [1, 128], strides = [1, 1]} : vector<1x384xf32> to vector<1x128xf32>
    %86 = vector.extract_strided_slice %82 {offsets = [0, 0], sizes = [1, 128], strides = [1, 1]} : vector<1x384xf32> to vector<1x128xf32>
    %87 = arith.addf %85, %86 : vector<1x128xf32>
    %88 = arith.negf %87 : vector<1x128xf32>
    %89 = math.exp %88 : vector<1x128xf32>
    %cst_30 = arith.constant 1.000000e+00 : f32
    %90 = vector.broadcast %cst_30 : f32 to vector<1x128xf32>
    %91 = arith.addf %90, %89 : vector<1x128xf32>
    %92 = arith.divf %90, %91 : vector<1x128xf32>
    %93 = vector.extract_strided_slice %84 {offsets = [0, 128], sizes = [1, 128], strides = [1, 1]} : vector<1x384xf32> to vector<1x128xf32>
    %94 = vector.extract_strided_slice %82 {offsets = [0, 128], sizes = [1, 128], strides = [1, 1]} : vector<1x384xf32> to vector<1x128xf32>
    %95 = arith.addf %93, %94 : vector<1x128xf32>
    %96 = arith.negf %95 : vector<1x128xf32>
    %97 = math.exp %96 : vector<1x128xf32>
    %cst_31 = arith.constant 1.000000e+00 : f32
    %98 = vector.broadcast %cst_31 : f32 to vector<1x128xf32>
    %99 = arith.addf %98, %97 : vector<1x128xf32>
    %100 = arith.divf %98, %99 : vector<1x128xf32>
    %101 = vector.extract_strided_slice %84 {offsets = [0, 256], sizes = [1, 128], strides = [1, 1]} : vector<1x384xf32> to vector<1x128xf32>
    %102 = vector.extract_strided_slice %82 {offsets = [0, 256], sizes = [1, 128], strides = [1, 1]} : vector<1x384xf32> to vector<1x128xf32>
    %103 = arith.mulf %92, %102 : vector<1x128xf32>
    %104 = arith.addf %101, %103 : vector<1x128xf32>
    %105 = math.tanh %104 : vector<1x128xf32>
    %cst_32 = arith.constant 1.000000e+00 : f32
    %106 = vector.broadcast %cst_32 : f32 to vector<1x128xf32>
    %107 = arith.subf %106, %100 : vector<1x128xf32>
    %108 = arith.mulf %107, %105 : vector<1x128xf32>
    %109 = arith.mulf %100, %78 : vector<1x128xf32>
    %110 = arith.addf %108, %109 : vector<1x128xf32>
    %111 = arith.index_cast %c2_i32 : i32 to index
    %c0_33 = arith.constant 0 : index
    %112 = vector.load %arg13[%111, %c0_33] : memref<8x128xf32, #tpu.memory_space<vmem>>, vector<1x128xf32>
    tpu.vector_store %arg13[%111, %c0_33], %110 {strides = array<i32>} : memref<8x128xf32, #tpu.memory_space<vmem>>, vector<1x128xf32>,
    %c3_i32 = arith.constant 3 : i32
    %cst_34 = arith.constant dense<0.000000e+00> : vector<1x384xf32>
    %113 = tpu.matmul %110, %14, %cst_34 {dimension_numbers = #tpu.dot_dimension_numbers<[1], [0], [0], [1], [0, 0, 1, 1], [], []>} : vector<1x128xf32>, vector<128x384xf32>, vector<1x384xf32> -> vector<1x384xf32>
    %114 = arith.addf %113, %15 : vector<1x384xf32>
    %115 = arith.index_cast %c3_i32 : i32 to index
    %c0_35 = arith.constant 0 : index
    %116 = vector.load %arg12[%115, %c0_35] : memref<8x384xf32, #tpu.memory_space<vmem>>, vector<1x384xf32>
    %117 = vector.extract_strided_slice %116 {offsets = [0, 0], sizes = [1, 128], strides = [1, 1]} : vector<1x384xf32> to vector<1x128xf32>
    %118 = vector.extract_strided_slice %114 {offsets = [0, 0], sizes = [1, 128], strides = [1, 1]} : vector<1x384xf32> to vector<1x128xf32>
    %119 = arith.addf %117, %118 : vector<1x128xf32>
    %120 = arith.negf %119 : vector<1x128xf32>
    %121 = math.exp %120 : vector<1x128xf32>
    %cst_36 = arith.constant 1.000000e+00 : f32
    %122 = vector.broadcast %cst_36 : f32 to vector<1x128xf32>
    %123 = arith.addf %122, %121 : vector<1x128xf32>
    %124 = arith.divf %122, %123 : vector<1x128xf32>
    %125 = vector.extract_strided_slice %116 {offsets = [0, 128], sizes = [1, 128], strides = [1, 1]} : vector<1x384xf32> to vector<1x128xf32>
    %126 = vector.extract_strided_slice %114 {offsets = [0, 128], sizes = [1, 128], strides = [1, 1]} : vector<1x384xf32> to vector<1x128xf32>
    %127 = arith.addf %125, %126 : vector<1x128xf32>
    %128 = arith.negf %127 : vector<1x128xf32>
    %129 = math.exp %128 : vector<1x128xf32>
    %cst_37 = arith.constant 1.000000e+00 : f32
    %130 = vector.broadcast %cst_37 : f32 to vector<1x128xf32>
    %131 = arith.addf %130, %129 : vector<1x128xf32>
    %132 = arith.divf %130, %131 : vector<1x128xf32>
    %133 = vector.extract_strided_slice %116 {offsets = [0, 256], sizes = [1, 128], strides = [1, 1]} : vector<1x384xf32> to vector<1x128xf32>
    %134 = vector.extract_strided_slice %114 {offsets = [0, 256], sizes = [1, 128], strides = [1, 1]} : vector<1x384xf32> to vector<1x128xf32>
    %135 = arith.mulf %124, %134 : vector<1x128xf32>
    %136 = arith.addf %133, %135 : vector<1x128xf32>
    %137 = math.tanh %136 : vector<1x128xf32>
    %cst_38 = arith.constant 1.000000e+00 : f32
    %138 = vector.broadcast %cst_38 : f32 to vector<1x128xf32>
    %139 = arith.subf %138, %132 : vector<1x128xf32>
    %140 = arith.mulf %139, %137 : vector<1x128xf32>
    %141 = arith.mulf %132, %110 : vector<1x128xf32>
    %142 = arith.addf %140, %141 : vector<1x128xf32>
    %143 = arith.index_cast %c3_i32 : i32 to index
    %c0_39 = arith.constant 0 : index
    %144 = vector.load %arg13[%143, %c0_39] : memref<8x128xf32, #tpu.memory_space<vmem>>, vector<1x128xf32>
    tpu.vector_store %arg13[%143, %c0_39], %142 {strides = array<i32>} : memref<8x128xf32, #tpu.memory_space<vmem>>, vector<1x128xf32>,
    %c4_i32 = arith.constant 4 : i32
    %cst_40 = arith.constant dense<0.000000e+00> : vector<1x384xf32>
    %145 = tpu.matmul %142, %14, %cst_40 {dimension_numbers = #tpu.dot_dimension_numbers<[1], [0], [0], [1], [0, 0, 1, 1], [], []>} : vector<1x128xf32>, vector<128x384xf32>, vector<1x384xf32> -> vector<1x384xf32>
    %146 = arith.addf %145, %15 : vector<1x384xf32>
    %147 = arith.index_cast %c4_i32 : i32 to index
    %c0_41 = arith.constant 0 : index
    %148 = vector.load %arg12[%147, %c0_41] : memref<8x384xf32, #tpu.memory_space<vmem>>, vector<1x384xf32>
    %149 = vector.extract_strided_slice %148 {offsets = [0, 0], sizes = [1, 128], strides = [1, 1]} : vector<1x384xf32> to vector<1x128xf32>
    %150 = vector.extract_strided_slice %146 {offsets = [0, 0], sizes = [1, 128], strides = [1, 1]} : vector<1x384xf32> to vector<1x128xf32>
    %151 = arith.addf %149, %150 : vector<1x128xf32>
    %152 = arith.negf %151 : vector<1x128xf32>
    %153 = math.exp %152 : vector<1x128xf32>
    %cst_42 = arith.constant 1.000000e+00 : f32
    %154 = vector.broadcast %cst_42 : f32 to vector<1x128xf32>
    %155 = arith.addf %154, %153 : vector<1x128xf32>
    %156 = arith.divf %154, %155 : vector<1x128xf32>
    %157 = vector.extract_strided_slice %148 {offsets = [0, 128], sizes = [1, 128], strides = [1, 1]} : vector<1x384xf32> to vector<1x128xf32>
    %158 = vector.extract_strided_slice %146 {offsets = [0, 128], sizes = [1, 128], strides = [1, 1]} : vector<1x384xf32> to vector<1x128xf32>
    %159 = arith.addf %157, %158 : vector<1x128xf32>
    %160 = arith.negf %159 : vector<1x128xf32>
    %161 = math.exp %160 : vector<1x128xf32>
    %cst_43 = arith.constant 1.000000e+00 : f32
    %162 = vector.broadcast %cst_43 : f32 to vector<1x128xf32>
    %163 = arith.addf %162, %161 : vector<1x128xf32>
    %164 = arith.divf %162, %163 : vector<1x128xf32>
    %165 = vector.extract_strided_slice %148 {offsets = [0, 256], sizes = [1, 128], strides = [1, 1]} : vector<1x384xf32> to vector<1x128xf32>
    %166 = vector.extract_strided_slice %146 {offsets = [0, 256], sizes = [1, 128], strides = [1, 1]} : vector<1x384xf32> to vector<1x128xf32>
    %167 = arith.mulf %156, %166 : vector<1x128xf32>
    %168 = arith.addf %165, %167 : vector<1x128xf32>
    %169 = math.tanh %168 : vector<1x128xf32>
    %cst_44 = arith.constant 1.000000e+00 : f32
    %170 = vector.broadcast %cst_44 : f32 to vector<1x128xf32>
    %171 = arith.subf %170, %164 : vector<1x128xf32>
    %172 = arith.mulf %171, %169 : vector<1x128xf32>
    %173 = arith.mulf %164, %142 : vector<1x128xf32>
    %174 = arith.addf %172, %173 : vector<1x128xf32>
    %175 = arith.index_cast %c4_i32 : i32 to index
    %c0_45 = arith.constant 0 : index
    %176 = vector.load %arg13[%175, %c0_45] : memref<8x128xf32, #tpu.memory_space<vmem>>, vector<1x128xf32>
    tpu.vector_store %arg13[%175, %c0_45], %174 {strides = array<i32>} : memref<8x128xf32, #tpu.memory_space<vmem>>, vector<1x128xf32>,
    %c5_i32 = arith.constant 5 : i32
    %cst_46 = arith.constant dense<0.000000e+00> : vector<1x384xf32>
    %177 = tpu.matmul %174, %14, %cst_46 {dimension_numbers = #tpu.dot_dimension_numbers<[1], [0], [0], [1], [0, 0, 1, 1], [], []>} : vector<1x128xf32>, vector<128x384xf32>, vector<1x384xf32> -> vector<1x384xf32>
    %178 = arith.addf %177, %15 : vector<1x384xf32>
    %179 = arith.index_cast %c5_i32 : i32 to index
    %c0_47 = arith.constant 0 : index
    %180 = vector.load %arg12[%179, %c0_47] : memref<8x384xf32, #tpu.memory_space<vmem>>, vector<1x384xf32>
    %181 = vector.extract_strided_slice %180 {offsets = [0, 0], sizes = [1, 128], strides = [1, 1]} : vector<1x384xf32> to vector<1x128xf32>
    %182 = vector.extract_strided_slice %178 {offsets = [0, 0], sizes = [1, 128], strides = [1, 1]} : vector<1x384xf32> to vector<1x128xf32>
    %183 = arith.addf %181, %182 : vector<1x128xf32>
    %184 = arith.negf %183 : vector<1x128xf32>
    %185 = math.exp %184 : vector<1x128xf32>
    %cst_48 = arith.constant 1.000000e+00 : f32
    %186 = vector.broadcast %cst_48 : f32 to vector<1x128xf32>
    %187 = arith.addf %186, %185 : vector<1x128xf32>
    %188 = arith.divf %186, %187 : vector<1x128xf32>
    %189 = vector.extract_strided_slice %180 {offsets = [0, 128], sizes = [1, 128], strides = [1, 1]} : vector<1x384xf32> to vector<1x128xf32>
    %190 = vector.extract_strided_slice %178 {offsets = [0, 128], sizes = [1, 128], strides = [1, 1]} : vector<1x384xf32> to vector<1x128xf32>
    %191 = arith.addf %189, %190 : vector<1x128xf32>
    %192 = arith.negf %191 : vector<1x128xf32>
    %193 = math.exp %192 : vector<1x128xf32>
    %cst_49 = arith.constant 1.000000e+00 : f32
    %194 = vector.broadcast %cst_49 : f32 to vector<1x128xf32>
    %195 = arith.addf %194, %193 : vector<1x128xf32>
    %196 = arith.divf %194, %195 : vector<1x128xf32>
    %197 = vector.extract_strided_slice %180 {offsets = [0, 256], sizes = [1, 128], strides = [1, 1]} : vector<1x384xf32> to vector<1x128xf32>
    %198 = vector.extract_strided_slice %178 {offsets = [0, 256], sizes = [1, 128], strides = [1, 1]} : vector<1x384xf32> to vector<1x128xf32>
    %199 = arith.mulf %188, %198 : vector<1x128xf32>
    %200 = arith.addf %197, %199 : vector<1x128xf32>
    %201 = math.tanh %200 : vector<1x128xf32>
    %cst_50 = arith.constant 1.000000e+00 : f32
    %202 = vector.broadcast %cst_50 : f32 to vector<1x128xf32>
    %203 = arith.subf %202, %196 : vector<1x128xf32>
    %204 = arith.mulf %203, %201 : vector<1x128xf32>
    %205 = arith.mulf %196, %174 : vector<1x128xf32>
    %206 = arith.addf %204, %205 : vector<1x128xf32>
    %207 = arith.index_cast %c5_i32 : i32 to index
    %c0_51 = arith.constant 0 : index
    %208 = vector.load %arg13[%207, %c0_51] : memref<8x128xf32, #tpu.memory_space<vmem>>, vector<1x128xf32>
    tpu.vector_store %arg13[%207, %c0_51], %206 {strides = array<i32>} : memref<8x128xf32, #tpu.memory_space<vmem>>, vector<1x128xf32>,
    %c6_i32 = arith.constant 6 : i32
    %cst_52 = arith.constant dense<0.000000e+00> : vector<1x384xf32>
    %209 = tpu.matmul %206, %14, %cst_52 {dimension_numbers = #tpu.dot_dimension_numbers<[1], [0], [0], [1], [0, 0, 1, 1], [], []>} : vector<1x128xf32>, vector<128x384xf32>, vector<1x384xf32> -> vector<1x384xf32>
    %210 = arith.addf %209, %15 : vector<1x384xf32>
    %211 = arith.index_cast %c6_i32 : i32 to index
    %c0_53 = arith.constant 0 : index
    %212 = vector.load %arg12[%211, %c0_53] : memref<8x384xf32, #tpu.memory_space<vmem>>, vector<1x384xf32>
    %213 = vector.extract_strided_slice %212 {offsets = [0, 0], sizes = [1, 128], strides = [1, 1]} : vector<1x384xf32> to vector<1x128xf32>
    %214 = vector.extract_strided_slice %210 {offsets = [0, 0], sizes = [1, 128], strides = [1, 1]} : vector<1x384xf32> to vector<1x128xf32>
    %215 = arith.addf %213, %214 : vector<1x128xf32>
    %216 = arith.negf %215 : vector<1x128xf32>
    %217 = math.exp %216 : vector<1x128xf32>
    %cst_54 = arith.constant 1.000000e+00 : f32
    %218 = vector.broadcast %cst_54 : f32 to vector<1x128xf32>
    %219 = arith.addf %218, %217 : vector<1x128xf32>
    %220 = arith.divf %218, %219 : vector<1x128xf32>
    %221 = vector.extract_strided_slice %212 {offsets = [0, 128], sizes = [1, 128], strides = [1, 1]} : vector<1x384xf32> to vector<1x128xf32>
    %222 = vector.extract_strided_slice %210 {offsets = [0, 128], sizes = [1, 128], strides = [1, 1]} : vector<1x384xf32> to vector<1x128xf32>
    %223 = arith.addf %221, %222 : vector<1x128xf32>
    %224 = arith.negf %223 : vector<1x128xf32>
    %225 = math.exp %224 : vector<1x128xf32>
    %cst_55 = arith.constant 1.000000e+00 : f32
    %226 = vector.broadcast %cst_55 : f32 to vector<1x128xf32>
    %227 = arith.addf %226, %225 : vector<1x128xf32>
    %228 = arith.divf %226, %227 : vector<1x128xf32>
    %229 = vector.extract_strided_slice %212 {offsets = [0, 256], sizes = [1, 128], strides = [1, 1]} : vector<1x384xf32> to vector<1x128xf32>
    %230 = vector.extract_strided_slice %210 {offsets = [0, 256], sizes = [1, 128], strides = [1, 1]} : vector<1x384xf32> to vector<1x128xf32>
    %231 = arith.mulf %220, %230 : vector<1x128xf32>
    %232 = arith.addf %229, %231 : vector<1x128xf32>
    %233 = math.tanh %232 : vector<1x128xf32>
    %cst_56 = arith.constant 1.000000e+00 : f32
    %234 = vector.broadcast %cst_56 : f32 to vector<1x128xf32>
    %235 = arith.subf %234, %228 : vector<1x128xf32>
    %236 = arith.mulf %235, %233 : vector<1x128xf32>
    %237 = arith.mulf %228, %206 : vector<1x128xf32>
    %238 = arith.addf %236, %237 : vector<1x128xf32>
    %239 = arith.index_cast %c6_i32 : i32 to index
    %c0_57 = arith.constant 0 : index
    %240 = vector.load %arg13[%239, %c0_57] : memref<8x128xf32, #tpu.memory_space<vmem>>, vector<1x128xf32>
    tpu.vector_store %arg13[%239, %c0_57], %238 {strides = array<i32>} : memref<8x128xf32, #tpu.memory_space<vmem>>, vector<1x128xf32>,
    %c7_i32 = arith.constant 7 : i32
    %cst_58 = arith.constant dense<0.000000e+00> : vector<1x384xf32>
    %241 = tpu.matmul %238, %14, %cst_58 {dimension_numbers = #tpu.dot_dimension_numbers<[1], [0], [0], [1], [0, 0, 1, 1], [], []>} : vector<1x128xf32>, vector<128x384xf32>, vector<1x384xf32> -> vector<1x384xf32>
    %242 = arith.addf %241, %15 : vector<1x384xf32>
    %243 = arith.index_cast %c7_i32 : i32 to index
    %c0_59 = arith.constant 0 : index
    %244 = vector.load %arg12[%243, %c0_59] : memref<8x384xf32, #tpu.memory_space<vmem>>, vector<1x384xf32>
    %245 = vector.extract_strided_slice %244 {offsets = [0, 0], sizes = [1, 128], strides = [1, 1]} : vector<1x384xf32> to vector<1x128xf32>
    %246 = vector.extract_strided_slice %242 {offsets = [0, 0], sizes = [1, 128], strides = [1, 1]} : vector<1x384xf32> to vector<1x128xf32>
    %247 = arith.addf %245, %246 : vector<1x128xf32>
    %248 = arith.negf %247 : vector<1x128xf32>
    %249 = math.exp %248 : vector<1x128xf32>
    %cst_60 = arith.constant 1.000000e+00 : f32
    %250 = vector.broadcast %cst_60 : f32 to vector<1x128xf32>
    %251 = arith.addf %250, %249 : vector<1x128xf32>
    %252 = arith.divf %250, %251 : vector<1x128xf32>
    %253 = vector.extract_strided_slice %244 {offsets = [0, 128], sizes = [1, 128], strides = [1, 1]} : vector<1x384xf32> to vector<1x128xf32>
    %254 = vector.extract_strided_slice %242 {offsets = [0, 128], sizes = [1, 128], strides = [1, 1]} : vector<1x384xf32> to vector<1x128xf32>
    %255 = arith.addf %253, %254 : vector<1x128xf32>
    %256 = arith.negf %255 : vector<1x128xf32>
    %257 = math.exp %256 : vector<1x128xf32>
    %cst_61 = arith.constant 1.000000e+00 : f32
    %258 = vector.broadcast %cst_61 : f32 to vector<1x128xf32>
    %259 = arith.addf %258, %257 : vector<1x128xf32>
    %260 = arith.divf %258, %259 : vector<1x128xf32>
    %261 = vector.extract_strided_slice %244 {offsets = [0, 256], sizes = [1, 128], strides = [1, 1]} : vector<1x384xf32> to vector<1x128xf32>
    %262 = vector.extract_strided_slice %242 {offsets = [0, 256], sizes = [1, 128], strides = [1, 1]} : vector<1x384xf32> to vector<1x128xf32>
    %263 = arith.mulf %252, %262 : vector<1x128xf32>
    %264 = arith.addf %261, %263 : vector<1x128xf32>
    %265 = math.tanh %264 : vector<1x128xf32>
    %cst_62 = arith.constant 1.000000e+00 : f32
    %266 = vector.broadcast %cst_62 : f32 to vector<1x128xf32>
    %267 = arith.subf %266, %260 : vector<1x128xf32>
    %268 = arith.mulf %267, %265 : vector<1x128xf32>
    %269 = arith.mulf %260, %238 : vector<1x128xf32>
    %270 = arith.addf %268, %269 : vector<1x128xf32>
    %271 = arith.index_cast %c7_i32 : i32 to index
    %c0_63 = arith.constant 0 : index
    %272 = vector.load %arg13[%271, %c0_63] : memref<8x128xf32, #tpu.memory_space<vmem>>, vector<1x128xf32>
    tpu.vector_store %arg13[%271, %c0_63], %270 {strides = array<i32>} : memref<8x128xf32, #tpu.memory_space<vmem>>, vector<1x128xf32>,
    %c8_i32 = arith.constant 8 : i32
    %c0_64 = arith.constant 0 : index
    %c0_65 = arith.constant 0 : index
    %273 = vector.load %arg13[%c0_64, %c0_65] : memref<8x128xf32, #tpu.memory_space<vmem>>, vector<8x128xf32>
    %c0_66 = arith.constant 0 : index
    %c0_67 = arith.constant 0 : index
    %274 = vector.load %arg7[%c0_66, %c0_67] : memref<128x128xf32, #tpu.memory_space<vmem>>, vector<128x128xf32>
    %cst_68 = arith.constant dense<0.000000e+00> : vector<8x128xf32>
    %275 = tpu.matmul %273, %274, %cst_68 {dimension_numbers = #tpu.dot_dimension_numbers<[1], [0], [0], [1], [0, 0, 1, 1], [], []>} : vector<8x128xf32>, vector<128x128xf32>, vector<8x128xf32> -> vector<8x128xf32>
    %c0_69 = arith.constant 0 : index
    %c0_70 = arith.constant 0 : index
    %276 = vector.load %arg8[%c0_69, %c0_70] : memref<1x128xf32, #tpu.memory_space<vmem>>, vector<1x128xf32>
    %277 = vector.broadcast %276 : vector<1x128xf32> to vector<8x128xf32>
    %278 = arith.addf %275, %277 : vector<8x128xf32>
    %c0_71 = arith.constant 0 : index
    %c0_72 = arith.constant 0 : index
    %279 = vector.load %arg10[%c0_71, %c0_72] : memref<8x128xf32, #tpu.memory_space<vmem>>, vector<8x128xf32>
    tpu.vector_store %arg10[%c0_71, %c0_72], %278 {strides = array<i32>} : memref<8x128xf32, #tpu.memory_space<vmem>>, vector<8x128xf32>,
    %c0_73 = arith.constant 0 : index
    %c0_74 = arith.constant 0 : index
    %280 = vector.load %arg11[%c0_73, %c0_74] : memref<1x128xf32, #tpu.memory_space<vmem>>, vector<1x128xf32>
    tpu.vector_store %arg11[%c0_73, %c0_74], %270 {strides = array<i32>} : memref<1x128xf32, #tpu.memory_space<vmem>>, vector<1x128xf32>,
    return
  }
  func.func @transform_0(%arg0: i32) -> (i32, i32) {
    %c0_i32 = arith.constant 0 : i32
    %c0_i32_0 = arith.constant 0 : i32
    %c0_i32_1 = arith.constant 0 : i32
    return %c0_i32, %c0_i32_0 : i32, i32
  }
  func.func @transform_1(%arg0: i32) -> (i32, i32) {
    %c0_i32 = arith.constant 0 : i32
    %c0_i32_0 = arith.constant 0 : i32
    %c0_i32_1 = arith.constant 0 : i32
    return %c0_i32, %c0_i32_0 : i32, i32
  }
  func.func @transform_2(%arg0: i32) -> (i32, i32) {
    %c0_i32 = arith.constant 0 : i32
    %c0_i32_0 = arith.constant 0 : i32
    %c0_i32_1 = arith.constant 0 : i32
    return %c0_i32, %c0_i32_0 : i32, i32
  }
  func.func @transform_3(%arg0: i32) -> (i32, i32) {
    %c0_i32 = arith.constant 0 : i32
    %c0_i32_0 = arith.constant 0 : i32
    %c0_i32_1 = arith.constant 0 : i32
    return %c0_i32, %c0_i32_0 : i32, i32
  }
  func.func @transform_4(%arg0: i32) -> (i32, i32) {
    %c0_i32 = arith.constant 0 : i32
    %c0_i32_0 = arith.constant 0 : i32
    %c0_i32_1 = arith.constant 0 : i32
    return %c0_i32, %c0_i32_0 : i32, i32
  }
  func.func @transform_5(%arg0: i32) -> (i32, i32) {
    %c0_i32 = arith.constant 0 : i32
    %c0_i32_0 = arith.constant 0 : i32
    %c0_i32_1 = arith.constant 0 : i32
    return %c0_i32, %c0_i32_0 : i32, i32
  }
  func.func @transform_6(%arg0: i32) -> (i32, i32) {
    %c0_i32 = arith.constant 0 : i32
    %c0_i32_0 = arith.constant 0 : i32
    %c0_i32_1 = arith.constant 0 : i32
    return %c0_i32, %c0_i32_0 : i32, i32
  }
  func.func @transform_7(%arg0: i32) -> (i32, i32) {
    %c0_i32 = arith.constant 0 : i32
    %c0_i32_0 = arith.constant 0 : i32
    %c0_i32_1 = arith.constant 0 : i32
    return %c0_i32, %c0_i32_0 : i32, i32
  }
  func.func @transform_8(%arg0: i32) -> (i32, i32) {
    %c0_i32 = arith.constant 0 : i32
    %c0_i32_0 = arith.constant 0 : i32
    %c0_i32_1 = arith.constant 0 : i32
    return %c0_i32, %c0_i32_0 : i32, i32
  }
  func.func @transform_9(%arg0: i32) -> (i32, i32) {
    %c0_i32 = arith.constant 0 : i32
    %c0_i32_0 = arith.constant 0 : i32
    %c0_i32_1 = arith.constant 0 : i32
    return %c0_i32, %c0_i32_0 : i32, i32
  }
  func.func @transform_10(%arg0: i32) -> (i32, i32) {
    %c0_i32 = arith.constant 0 : i32
    %c0_i32_0 = arith.constant 0 : i32
    %c0_i32_1 = arith.constant 0 : i32
    return %c0_i32, %c0_i32_0 : i32, i32
  }
}

</mosaic_0001>

<llo_original>
// kernel: rnn_forward_sequence.1
$region0: #{rnn_forward_sequence.1}
  #allocation0 [shape = 'u32[]', space=smem, size = 0x4, offset = 0x4, fixed_abs, tag = 'smem constant byte address 0x4 - core index']
  #allocation1 [shape = 'u32[72,128]{1,0:T(1,128)}', space=vmem, size = 0x9000, scoped, tag = 'internal scratch']
  #allocation2 [shape = 'f32[8,384]{1,0:T(8,128)}', space=vmem, size = 0x3000, scoped, tag = 'scratch operand']
  #allocation3 [shape = 'f32[8,128]{1,0:T(8,128)}', space=vmem, size = 0x1000, scoped, tag = 'scratch operand']
  %s0 = inlined_call_operand.vmem [shape: s32[8,1], index: 0, kind: input, shape index: {}]
  %s1 = inlined_call_operand.vmem [shape: f32[128,128], index: 1, kind: input, shape index: {}]
  %s2 = inlined_call_operand.vmem [shape: f32[128,384], index: 2, kind: input, shape index: {}]
  %s3 = inlined_call_operand.vmem [shape: f32[1,384], index: 3, kind: input, shape index: {}]
  %s4 = inlined_call_operand.vmem [shape: f32[128,384], index: 4, kind: input, shape index: {}]
  %s5 = inlined_call_operand.vmem [shape: f32[1,384], index: 5, kind: input, shape index: {}]
  %s6 = inlined_call_operand.vmem [shape: f32[128,128], index: 6, kind: input, shape index: {}]
  %s7 = inlined_call_operand.vmem [shape: f32[1,128], index: 7, kind: input, shape index: {}]
  %s8 = inlined_call_operand.vmem [shape: f32[1,128], index: 8, kind: input, shape index: {}]
  %s9 = inlined_call_operand.hbm [shape: f32[8,128], index: 9, kind: output, shape index: {0}]
  %s10 = inlined_call_operand.vmem [shape: f32[1,128], index: 10, kind: output, shape index: {1}]
  %11 = xla_tuple %s9, %s10
  %s12 = sld [smem:[#allocation0]]
  $region54: #{rnn_forward_sequence.1} parent=0
    _
  %s14 = ssub.s32 1, %s12
  %s15 = scalar_select 0, %s14, %s12
  $region1: #{rnn_forward_sequence.1} parent=0
    #allocation4 [shape = 'u8[4096]{0}', space=vmem, size = 0x1000, scoped, tag = 'output window, operand 0, single buffered']
    #allocation5 [shape = 's32[1]{0}', space=sflag, size = 0x4, scoped, tag = 'scoped memory for rnn_forward_sequence.1']
    %16 = vsyncpa [#allocation5], 0
    // Predicated region
    $region2: #{rnn_forward_sequence.1} parent=1 // pred_check
      _
    $region3: #{rnn_forward_sequence.1} parent=1 // pred_check_branch
      %18 = sbr.rel (0) target = $region5
    $region4: #{rnn_forward_sequence.1} parent=1 // pred_region
      _
    $region5: #{rnn_forward_sequence.1} parent=1 // pred_fallthru
      _
    // Predicated region
    $region6: #{rnn_forward_sequence.1} parent=1 // pred_check
      _
    $region7: #{rnn_forward_sequence.1} parent=1 // pred_check_branch
      %20 = sbr.rel (0) target = $region9
    $region8: #{rnn_forward_sequence.1} parent=1 // pred_region
      _
    $region9: #{rnn_forward_sequence.1} parent=1 // pred_fallthru
      _
    // Predicated region
    $region10: #{rnn_forward_sequence.1} parent=1 // pred_check
      _
    $region11: #{rnn_forward_sequence.1} parent=1 // pred_check_branch
      %22 = sbr.rel (0) target = $region13
    $region12: #{rnn_forward_sequence.1} parent=1 // pred_region
      _
    $region13: #{rnn_forward_sequence.1} parent=1 // pred_fallthru
      _
    // Predicated region
    $region14: #{rnn_forward_sequence.1} parent=1 // pred_check
      _
    $region15: #{rnn_forward_sequence.1} parent=1 // pred_check_branch
      %24 = sbr.rel (0) target = $region17
    $region16: #{rnn_forward_sequence.1} parent=1 // pred_region
      _
    $region17: #{rnn_forward_sequence.1} parent=1 // pred_fallthru
      _
    // Predicated region
    $region18: #{rnn_forward_sequence.1} parent=1 // pred_check
      _
    $region19: #{rnn_forward_sequence.1} parent=1 // pred_check_branch
      %26 = sbr.rel (0) target = $region21
    $region20: #{rnn_forward_sequence.1} parent=1 // pred_region
      _
    $region21: #{rnn_forward_sequence.1} parent=1 // pred_fallthru
      _
    // Predicated region
    $region22: #{rnn_forward_sequence.1} parent=1 // pred_check
      _
    $region23: #{rnn_forward_sequence.1} parent=1 // pred_check_branch
      %28 = sbr.rel (0) target = $region25
    $region24: #{rnn_forward_sequence.1} parent=1 // pred_region
      _
    $region25: #{rnn_forward_sequence.1} parent=1 // pred_fallthru
      _
    // Predicated region
    $region26: #{rnn_forward_sequence.1} parent=1 // pred_check
      _
    $region27: #{rnn_forward_sequence.1} parent=1 // pred_check_branch
      %30 = sbr.rel (0) target = $region29
    $region28: #{rnn_forward_sequence.1} parent=1 // pred_region
      _
    $region29: #{rnn_forward_sequence.1} parent=1 // pred_fallthru
      _
    // Predicated region
    $region30: #{rnn_forward_sequence.1} parent=1 // pred_check
      _
    $region31: #{rnn_forward_sequence.1} parent=1 // pred_check_branch
      %32 = sbr.rel (0) target = $region33
    $region32: #{rnn_forward_sequence.1} parent=1 // pred_region
      _
    $region33: #{rnn_forward_sequence.1} parent=1 // pred_fallthru
      _
    // Predicated region
    $region34: #{rnn_forward_sequence.1} parent=1 // pred_check
      _
    $region35: #{rnn_forward_sequence.1} parent=1 // pred_check_branch
      %34 = sbr.rel (0) target = $region37
    $region36: #{rnn_forward_sequence.1} parent=1 // pred_region
      _
    $region37: #{rnn_forward_sequence.1} parent=1 // pred_fallthru
      _
    %v35 = vld [vmem:[%s0] sm:$0xff]
    %v36 = vlaneseq
    %v37 = vand.u32 %v36, 127
    %38 = vset.pattern.permute.xlu0 0
    %39 = vperm.xlu0 %38, %v35
    %v40 = vpop.permute.xlu0 %39
    %vm41 = vcmp.eq.s32.totalorder %v37, %v40
    %v42 = vsel %vm41, 1, 0
    %v43 = vcvt.s32.f32 %v42
    %v44 = vld [vmem:[%s1] sm:$0xff]
    %v45 = vld [vmem:[%s1 + $0x8] sm:$0xff]
    %v46 = vld [vmem:[%s1 + $0x10] sm:$0xff]
    %v47 = vld [vmem:[%s1 + $0x18] sm:$0xff]
    %v48 = vld [vmem:[%s1 + $0x20] sm:$0xff]
    %v49 = vld [vmem:[%s1 + $0x28] sm:$0xff]
    %v50 = vld [vmem:[%s1 + $0x30] sm:$0xff]
    %v51 = vld [vmem:[%s1 + $0x38] sm:$0xff]
    %v52 = vld [vmem:[%s1 + $0x40] sm:$0xff]
    %v53 = vld [vmem:[%s1 + $0x48] sm:$0xff]
    %v54 = vld [vmem:[%s1 + $0x50] sm:$0xff]
    %v55 = vld [vmem:[%s1 + $0x58] sm:$0xff]
    %v56 = vld [vmem:[%s1 + $0x60] sm:$0xff]
    %v57 = vld [vmem:[%s1 + $0x68] sm:$0xff]
    %v58 = vld [vmem:[%s1 + $0x70] sm:$0xff]
    %v59 = vld [vmem:[%s1 + $0x78] sm:$0xff]
    %60 = vmatpush.msra.mxu0 %v59
    %61 = vmatpush.msra.mxu0 %v58
    %62 = vmatpush.msra.mxu0 %v57
    %63 = vmatpush.msra.mxu0 %v56
    %64 = vmatpush.msra.mxu0 %v55
    %65 = vmatpush.msra.mxu0 %v54
    %66 = vmatpush.msra.mxu0 %v53
    %67 = vmatpush.msra.mxu0 %v52
    %68 = vmatpush.msra.mxu0 %v51
    %69 = vmatpush.msra.mxu0 %v50
    %70 = vmatpush.msra.mxu0 %v49
    %71 = vmatpush.msra.mxu0 %v48
    %72 = vmatpush.msra.mxu0 %v47
    %73 = vmatpush.msra.mxu0 %v46
    %74 = vmatpush.msra.mxu0 %v45
    %75 = vmatpush.msra.mxu0 %v44
    %76 = vmatmul.f32.gmra.mxu0 %v43
    %v77 = vpop.f32.mrf.mxu0
    %v78 = vadd.f32 0.0, %v77
    %79 = vdwg.mxu0
    %v80 = vld [vmem:[%s2] sm:$0xff]
    %v81 = vld [vmem:[%s2 + $0x8] sm:$0xff]
    %v82 = vld [vmem:[%s2 + $0x10] sm:$0xff]
    %v83 = vld [vmem:[%s2 + $0x18] sm:$0xff]
    %v84 = vld [vmem:[%s2 + $0x20] sm:$0xff]
    %v85 = vld [vmem:[%s2 + $0x28] sm:$0xff]
    %v86 = vld [vmem:[%s2 + $0x30] sm:$0xff]
    %v87 = vld [vmem:[%s2 + $0x38] sm:$0xff]
    %v88 = vld [vmem:[%s2 + $0x40] sm:$0xff]
    %v89 = vld [vmem:[%s2 + $0x48] sm:$0xff]
    %v90 = vld [vmem:[%s2 + $0x50] sm:$0xff]
    %v91 = vld [vmem:[%s2 + $0x58] sm:$0xff]
    %v92 = vld [vmem:[%s2 + $0x60] sm:$0xff]
    %v93 = vld [vmem:[%s2 + $0x68] sm:$0xff]
    %v94 = vld [vmem:[%s2 + $0x70] sm:$0xff]
    %v95 = vld [vmem:[%s2 + $0x78] sm:$0xff]
    %v96 = vld [vmem:[%s2 + $0x80] sm:$0xff]
    %v97 = vld [vmem:[%s2 + $0x88] sm:$0xff]
    %v98 = vld [vmem:[%s2 + $0x90] sm:$0xff]
    %v99 = vld [vmem:[%s2 + $0x98] sm:$0xff]
    %v100 = vld [vmem:[%s2 + $0xa0] sm:$0xff]
    %v101 = vld [vmem:[%s2 + $0xa8] sm:$0xff]
    %v102 = vld [vmem:[%s2 + $0xb0] sm:$0xff]
    %v103 = vld [vmem:[%s2 + $0xb8] sm:$0xff]
    %v104 = vld [vmem:[%s2 + $0xc0] sm:$0xff]
    %v105 = vld [vmem:[%s2 + $0xc8] sm:$0xff]
    %v106 = vld [vmem:[%s2 + $0xd0] sm:$0xff]
    %v107 = vld [vmem:[%s2 + $0xd8] sm:$0xff]
    %v108 = vld [vmem:[%s2 + $0xe0] sm:$0xff]
    %v109 = vld [vmem:[%s2 + $0xe8] sm:$0xff]
    %v110 = vld [vmem:[%s2 + $0xf0] sm:$0xff]
    %v111 = vld [vmem:[%s2 + $0xf8] sm:$0xff]
    %v112 = vld [vmem:[%s2 + $0x100] sm:$0xff]
    %v113 = vld [vmem:[%s2 + $0x108] sm:$0xff]
    %v114 = vld [vmem:[%s2 + $0x110] sm:$0xff]
    %v115 = vld [vmem:[%s2 + $0x118] sm:$0xff]
    %v116 = vld [vmem:[%s2 + $0x120] sm:$0xff]
    %v117 = vld [vmem:[%s2 + $0x128] sm:$0xff]
    %v118 = vld [vmem:[%s2 + $0x130] sm:$0xff]
    %v119 = vld [vmem:[%s2 + $0x138] sm:$0xff]
    %v120 = vld [vmem:[%s2 + $0x140] sm:$0xff]
    %v121 = vld [vmem:[%s2 + $0x148] sm:$0xff]
    %v122 = vld [vmem:[%s2 + $0x150] sm:$0xff]
    %v123 = vld [vmem:[%s2 + $0x158] sm:$0xff]
    %v124 = vld [vmem:[%s2 + $0x160] sm:$0xff]
    %v125 = vld [vmem:[%s2 + $0x168] sm:$0xff]
    %v126 = vld [vmem:[%s2 + $0x170] sm:$0xff]
    %v127 = vld [vmem:[%s2 + $0x178] sm:$0xff]
    %v128 = vld [vmem:[%s3] sm:$0x7]
    %v130 = vperm.slane %v128, 0
    %v131 = vperm.slane %v128, 1
    %v132 = vperm.slane %v128, 2
    %136 = vmatpush.msra.mxu0 %v125
    %137 = vmatpush.msra.mxu0 %v122
    %138 = vmatpush.msra.mxu0 %v119
    %139 = vmatpush.msra.mxu0 %v116
    %140 = vmatpush.msra.mxu0 %v113
    %141 = vmatpush.msra.mxu0 %v110
    %142 = vmatpush.msra.mxu0 %v107
    %143 = vmatpush.msra.mxu0 %v104
    %144 = vmatpush.msra.mxu0 %v101
    %145 = vmatpush.msra.mxu0 %v98
    %146 = vmatpush.msra.mxu0 %v95
    %147 = vmatpush.msra.mxu0 %v92
    %148 = vmatpush.msra.mxu0 %v89
    %149 = vmatpush.msra.mxu0 %v86
    %150 = vmatpush.msra.mxu0 %v83
    %151 = vmatpush.msra.mxu0 %v80
    %152 = vmatmul.f32.gmra.mxu0 %v78
    %v153 = vpop.f32.mrf.mxu0
    %v154 = vadd.f32 %v130, %v153
    %155 = vdwg.mxu0
    %156 = vmatpush.msra.mxu0 %v126
    %157 = vmatpush.msra.mxu0 %v123
    %158 = vmatpush.msra.mxu0 %v120
    %159 = vmatpush.msra.mxu0 %v117
    %160 = vmatpush.msra.mxu0 %v114
    %161 = vmatpush.msra.mxu0 %v111
    %162 = vmatpush.msra.mxu0 %v108
    %163 = vmatpush.msra.mxu0 %v105
    %164 = vmatpush.msra.mxu0 %v102
    %165 = vmatpush.msra.mxu0 %v99
    %166 = vmatpush.msra.mxu0 %v96
    %167 = vmatpush.msra.mxu0 %v93
    %168 = vmatpush.msra.mxu0 %v90
    %169 = vmatpush.msra.mxu0 %v87
    %170 = vmatpush.msra.mxu0 %v84
    %171 = vmatpush.msra.mxu0 %v81
    %172 = vmatmul.f32.gmra.mxu0 %v78
    %v173 = vpop.f32.mrf.mxu0
    %v174 = vadd.f32 %v131, %v173
    %175 = vdwg.mxu0
    %176 = vmatpush.msra.mxu0 %v127
    %177 = vmatpush.msra.mxu0 %v124
    %178 = vmatpush.msra.mxu0 %v121
    %179 = vmatpush.msra.mxu0 %v118
    %180 = vmatpush.msra.mxu0 %v115
    %181 = vmatpush.msra.mxu0 %v112
    %182 = vmatpush.msra.mxu0 %v109
    %183 = vmatpush.msra.mxu0 %v106
    %184 = vmatpush.msra.mxu0 %v103
    %185 = vmatpush.msra.mxu0 %v100
    %186 = vmatpush.msra.mxu0 %v97
    %187 = vmatpush.msra.mxu0 %v94
    %188 = vmatpush.msra.mxu0 %v91
    %189 = vmatpush.msra.mxu0 %v88
    %190 = vmatpush.msra.mxu0 %v85
    %191 = vmatpush.msra.mxu0 %v82
    %192 = vmatmul.f32.gmra.mxu0 %v78
    %v193 = vpop.f32.mrf.mxu0
    %v194 = vadd.f32 %v132, %v193
    %195 = vdwg.mxu0
    %196 = vst [vmem:[#allocation2] sm:$0xff] %v154
    %197 = vst [vmem:[#allocation2 + $0x8] sm:$0xff] %v174
    %198 = vst [vmem:[#allocation2 + $0x10] sm:$0xff] %v194
    %v199 = vld [vmem:[%s4] sm:$0xff]
    %v200 = vld [vmem:[%s4 + $0x8] sm:$0xff]
    %v201 = vld [vmem:[%s4 + $0x10] sm:$0xff]
    %v202 = vld [vmem:[%s4 + $0x18] sm:$0xff]
    %v203 = vld [vmem:[%s4 + $0x20] sm:$0xff]
    %v204 = vld [vmem:[%s4 + $0x28] sm:$0xff]
    %v205 = vld [vmem:[%s4 + $0x30] sm:$0xff]
    %v206 = vld [vmem:[%s4 + $0x38] sm:$0xff]
    %v207 = vld [vmem:[%s4 + $0x40] sm:$0xff]
    %v208 = vld [vmem:[%s4 + $0x48] sm:$0xff]
    %v209 = vld [vmem:[%s4 + $0x50] sm:$0xff]
    %v210 = vld [vmem:[%s4 + $0x58] sm:$0xff]
    %v211 = vld [vmem:[%s4 + $0x60] sm:$0xff]
    %v212 = vld [vmem:[%s4 + $0x68] sm:$0xff]
    %v213 = vld [vmem:[%s4 + $0x70] sm:$0xff]
    %v214 = vld [vmem:[%s4 + $0x78] sm:$0xff]
    %v215 = vld [vmem:[%s4 + $0x80] sm:$0xff]
    %v216 = vld [vmem:[%s4 + $0x88] sm:$0xff]
    %v217 = vld [vmem:[%s4 + $0x90] sm:$0xff]
    %v218 = vld [vmem:[%s4 + $0x98] sm:$0xff]
    %v219 = vld [vmem:[%s4 + $0xa0] sm:$0xff]
    %v220 = vld [vmem:[%s4 + $0xa8] sm:$0xff]
    %v221 = vld [vmem:[%s4 + $0xb0] sm:$0xff]
    %v222 = vld [vmem:[%s4 + $0xb8] sm:$0xff]
    %v223 = vld [vmem:[%s4 + $0xc0] sm:$0xff]
    %v224 = vld [vmem:[%s4 + $0xc8] sm:$0xff]
    %v225 = vld [vmem:[%s4 + $0xd0] sm:$0xff]
    %v226 = vld [vmem:[%s4 + $0xd8] sm:$0xff]
    %v227 = vld [vmem:[%s4 + $0xe0] sm:$0xff]
    %v228 = vld [vmem:[%s4 + $0xe8] sm:$0xff]
    %v229 = vld [vmem:[%s4 + $0xf0] sm:$0xff]
    %v230 = vld [vmem:[%s4 + $0xf8] sm:$0xff]
    %v231 = vld [vmem:[%s4 + $0x100] sm:$0xff]
    %v232 = vld [vmem:[%s4 + $0x108] sm:$0xff]
    %v233 = vld [vmem:[%s4 + $0x110] sm:$0xff]
    %v234 = vld [vmem:[%s4 + $0x118] sm:$0xff]
    %v235 = vld [vmem:[%s4 + $0x120] sm:$0xff]
    %v236 = vld [vmem:[%s4 + $0x128] sm:$0xff]
    %v237 = vld [vmem:[%s4 + $0x130] sm:$0xff]
    %v238 = vld [vmem:[%s4 + $0x138] sm:$0xff]
    %v239 = vld [vmem:[%s4 + $0x140] sm:$0xff]
    %v240 = vld [vmem:[%s4 + $0x148] sm:$0xff]
    %v241 = vld [vmem:[%s4 + $0x150] sm:$0xff]
    %v242 = vld [vmem:[%s4 + $0x158] sm:$0xff]
    %v243 = vld [vmem:[%s4 + $0x160] sm:$0xff]
    %v244 = vld [vmem:[%s4 + $0x168] sm:$0xff]
    %v245 = vld [vmem:[%s4 + $0x170] sm:$0xff]
    %v246 = vld [vmem:[%s4 + $0x178] sm:$0xff]
    %v247 = vld [vmem:[%s5] sm:$0x7]
    %v248 = vld [vmem:[%s8] sm:$0x1]
    %v250 = vperm.slane %v247, 0
    %v251 = vperm.slane %v247, 1
    %v252 = vperm.slane %v247, 2
    %256 = vmatpush.msra.mxu0 %v244
    %257 = vmatpush.msra.mxu0 %v241
    %258 = vmatpush.msra.mxu0 %v238
    %259 = vmatpush.msra.mxu0 %v235
    %260 = vmatpush.msra.mxu0 %v232
    %261 = vmatpush.msra.mxu0 %v229
    %262 = vmatpush.msra.mxu0 %v226
    %263 = vmatpush.msra.mxu0 %v223
    %264 = vmatpush.msra.mxu0 %v220
    %265 = vmatpush.msra.mxu0 %v217
    %266 = vmatpush.msra.mxu0 %v214
    %267 = vmatpush.msra.mxu0 %v211
    %268 = vmatpush.msra.mxu0 %v208
    %269 = vmatpush.msra.mxu0 %v205
    %270 = vmatpush.msra.mxu0 %v202
    %271 = vmatpush.msra.mxu0 %v199
    %272 = vmatmul.f32.gmra.mxu0 %v248
    %v273 = vpop.f32.mrf.mxu0
    %v274 = vadd.f32 %v250, %v273
    %275 = vdwg.mxu0
    %276 = vmatpush.msra.mxu0 %v245
    %277 = vmatpush.msra.mxu0 %v242
    %278 = vmatpush.msra.mxu0 %v239
    %279 = vmatpush.msra.mxu0 %v236
    %280 = vmatpush.msra.mxu0 %v233
    %281 = vmatpush.msra.mxu0 %v230
    %282 = vmatpush.msra.mxu0 %v227
    %283 = vmatpush.msra.mxu0 %v224
    %284 = vmatpush.msra.mxu0 %v221
    %285 = vmatpush.msra.mxu0 %v218
    %286 = vmatpush.msra.mxu0 %v215
    %287 = vmatpush.msra.mxu0 %v212
    %288 = vmatpush.msra.mxu0 %v209
    %289 = vmatpush.msra.mxu0 %v206
    %290 = vmatpush.msra.mxu0 %v203
    %291 = vmatpush.msra.mxu0 %v200
    %292 = vmatmul.f32.gmra.mxu0 %v248
    %v293 = vpop.f32.mrf.mxu0
    %v294 = vadd.f32 %v251, %v293
    %295 = vdwg.mxu0
    %296 = vmatpush.msra.mxu0 %v246
    %297 = vmatpush.msra.mxu0 %v243
    %298 = vmatpush.msra.mxu0 %v240
    %299 = vmatpush.msra.mxu0 %v237
    %300 = vmatpush.msra.mxu0 %v234
    %301 = vmatpush.msra.mxu0 %v231
    %302 = vmatpush.msra.mxu0 %v228
    %303 = vmatpush.msra.mxu0 %v225
    %304 = vmatpush.msra.mxu0 %v222
    %305 = vmatpush.msra.mxu0 %v219
    %306 = vmatpush.msra.mxu0 %v216
    %307 = vmatpush.msra.mxu0 %v213
    %308 = vmatpush.msra.mxu0 %v210
    %309 = vmatpush.msra.mxu0 %v207
    %310 = vmatpush.msra.mxu0 %v204
    %311 = vmatpush.msra.mxu0 %v201
    %312 = vmatmul.f32.gmra.mxu0 %v248
    %v313 = vpop.f32.mrf.mxu0
    %v314 = vadd.f32 %v252, %v313
    %315 = vdwg.mxu0
    %v316 = vld [vmem:[#allocation2] ss:$8 sm:$0x7]
    %v317 = vadd.f32 %v316, %v274
    %v318 = vxor.u32 %v317, 2147483648
    %v319 = vmul.f32 %v318, 1.442695
    %v320 = vpow.pop %v319
    %v321 = vadd.f32 %v320, 1.0
    %v322 = vrcp.pop %v321
    %v323 = vmul.f32 %v321, %v322
    %v324 = vsub.f32 1.0, %v323
    %v325 = vmul.f32 %v322, %v324
    %v326 = vadd.f32 %v322, %v325
    %vm327 = vweird.f32 %v321
    %vm328 = vweird.f32 %v322
    %vm329 = vmor %vm327, %vm328
    %v330 = vsel %vm329, %v322, %v326
    %v331 = vand.u32 2147483647, %v321
    %vm332 = vcmp.eq.f32.partialorder %v331, 8.507059e+37
    %v333 = vand.u32 %v321, 2147483648
    %v334 = vor.u32 1.1754944e-38, %v333
    %v335 = vsel %vm332, %v334, %v330
    %v336 = vmul.f32 1.0, %v335
    %v338 = vrot.slane %v316, 1
    %v340 = vadd.f32 %v338, %v294
    %v341 = vxor.u32 %v340, 2147483648
    %v342 = vmul.f32 %v341, 1.442695
    %v343 = vpow.pop %v342
    %v344 = vadd.f32 %v343, 1.0
    %v345 = vrcp.pop %v344
    %v346 = vmul.f32 %v344, %v345
    %v347 = vsub.f32 1.0, %v346
    %v348 = vmul.f32 %v345, %v347
    %v349 = vadd.f32 %v345, %v348
    %vm350 = vweird.f32 %v344
    %vm351 = vweird.f32 %v345
    %vm352 = vmor %vm350, %vm351
    %v353 = vsel %vm352, %v345, %v349
    %v354 = vand.u32 2147483647, %v344
    %vm355 = vcmp.eq.f32.partialorder %v354, 8.507059e+37
    %v356 = vand.u32 %v344, 2147483648
    %v357 = vor.u32 1.1754944e-38, %v356
    %v358 = vsel %vm355, %v357, %v353
    %v359 = vmul.f32 1.0, %v358
    %v360 = vmul.f32 %v336, %v314
    %v361 = vrot.slane %v316, 2
    %v363 = vadd.f32 %v361, %v360
    %v364 = vtanh.pop %v363
    %v365 = vsub.f32 1.0, %v359
    %v366 = vmul.f32 %v365, %v364
    %v367 = vmul.f32 %v359, %v248
    %v368 = vadd.f32 %v366, %v367
    %369 = vst [vmem:[#allocation3] sm:$0x1] %v368
    %370 = vmatpush.msra.mxu0 %v244
    %371 = vmatpush.msra.mxu0 %v241
    %372 = vmatpush.msra.mxu0 %v238
    %373 = vmatpush.msra.mxu0 %v235
    %374 = vmatpush.msra.mxu0 %v232
    %375 = vmatpush.msra.mxu0 %v229
    %376 = vmatpush.msra.mxu0 %v226
    %377 = vmatpush.msra.mxu0 %v223
    %378 = vmatpush.msra.mxu0 %v220
    %379 = vmatpush.msra.mxu0 %v217
    %380 = vmatpush.msra.mxu0 %v214
    %381 = vmatpush.msra.mxu0 %v211
    %382 = vmatpush.msra.mxu0 %v208
    %383 = vmatpush.msra.mxu0 %v205
    %384 = vmatpush.msra.mxu0 %v202
    %385 = vmatpush.msra.mxu0 %v199
    %386 = vmatmul.f32.gmra.mxu0 %v368
    %v387 = vpop.f32.mrf.mxu0
    %v388 = vadd.f32 %v250, %v387
    %389 = vdwg.mxu0
    %390 = vmatpush.msra.mxu0 %v245
    %391 = vmatpush.msra.mxu0 %v242
    %392 = vmatpush.msra.mxu0 %v239
    %393 = vmatpush.msra.mxu0 %v236
    %394 = vmatpush.msra.mxu0 %v233
    %395 = vmatpush.msra.mxu0 %v230
    %396 = vmatpush.msra.mxu0 %v227
    %397 = vmatpush.msra.mxu0 %v224
    %398 = vmatpush.msra.mxu0 %v221
    %399 = vmatpush.msra.mxu0 %v218
    %400 = vmatpush.msra.mxu0 %v215
    %401 = vmatpush.msra.mxu0 %v212
    %402 = vmatpush.msra.mxu0 %v209
    %403 = vmatpush.msra.mxu0 %v206
    %404 = vmatpush.msra.mxu0 %v203
    %405 = vmatpush.msra.mxu0 %v200
    %406 = vmatmul.f32.gmra.mxu0 %v368
    %v407 = vpop.f32.mrf.mxu0
    %v408 = vadd.f32 %v251, %v407
    %409 = vdwg.mxu0
    %410 = vmatpush.msra.mxu0 %v246
    %411 = vmatpush.msra.mxu0 %v243
    %412 = vmatpush.msra.mxu0 %v240
    %413 = vmatpush.msra.mxu0 %v237
    %414 = vmatpush.msra.mxu0 %v234
    %415 = vmatpush.msra.mxu0 %v231
    %416 = vmatpush.msra.mxu0 %v228
    %417 = vmatpush.msra.mxu0 %v225
    %418 = vmatpush.msra.mxu0 %v222
    %419 = vmatpush.msra.mxu0 %v219
    %420 = vmatpush.msra.mxu0 %v216
    %421 = vmatpush.msra.mxu0 %v213
    %422 = vmatpush.msra.mxu0 %v210
    %423 = vmatpush.msra.mxu0 %v207
    %424 = vmatpush.msra.mxu0 %v204
    %425 = vmatpush.msra.mxu0 %v201
    %426 = vmatmul.f32.gmra.mxu0 %v368
    %v427 = vpop.f32.mrf.mxu0
    %v428 = vadd.f32 %v252, %v427
    %429 = vdwg.mxu0
    %s430 = scalar_lea.vmem [#allocation2], 1
    %v431 = vld [vmem:[%s430] ss:$8 sm:$0x7]
    %v432 = vadd.f32 %v431, %v388
    %v433 = vxor.u32 %v432, 2147483648
    %v434 = vmul.f32 %v433, 1.442695
    %v435 = vpow.pop %v434
    %v436 = vadd.f32 %v435, 1.0
    %v437 = vrcp.pop %v436
    %v438 = vmul.f32 %v436, %v437
    %v439 = vsub.f32 1.0, %v438
    %v440 = vmul.f32 %v437, %v439
    %v441 = vadd.f32 %v437, %v440
    %vm442 = vweird.f32 %v436
    %vm443 = vweird.f32 %v437
    %vm444 = vmor %vm442, %vm443
    %v445 = vsel %vm444, %v437, %v441
    %v446 = vand.u32 2147483647, %v436
    %vm447 = vcmp.eq.f32.partialorder %v446, 8.507059e+37
    %v448 = vand.u32 %v436, 2147483648
    %v449 = vor.u32 1.1754944e-38, %v448
    %v450 = vsel %vm447, %v449, %v445
    %v451 = vmul.f32 1.0, %v450
    %v453 = vrot.slane %v431, 1
    %v455 = vadd.f32 %v453, %v408
    %v456 = vxor.u32 %v455, 2147483648
    %v457 = vmul.f32 %v456, 1.442695
    %v458 = vpow.pop %v457
    %v459 = vadd.f32 %v458, 1.0
    %v460 = vrcp.pop %v459
    %v461 = vmul.f32 %v459, %v460
    %v462 = vsub.f32 1.0, %v461
    %v463 = vmul.f32 %v460, %v462
    %v464 = vadd.f32 %v460, %v463
    %vm465 = vweird.f32 %v459
    %vm466 = vweird.f32 %v460
    %vm467 = vmor %vm465, %vm466
    %v468 = vsel %vm467, %v460, %v464
    %v469 = vand.u32 2147483647, %v459
    %vm470 = vcmp.eq.f32.partialorder %v469, 8.507059e+37
    %v471 = vand.u32 %v459, 2147483648
    %v472 = vor.u32 1.1754944e-38, %v471
    %v473 = vsel %vm470, %v472, %v468
    %v474 = vmul.f32 1.0, %v473
    %v475 = vmul.f32 %v451, %v428
    %v476 = vrot.slane %v431, 2
    %v478 = vadd.f32 %v476, %v475
    %v479 = vtanh.pop %v478
    %v480 = vsub.f32 1.0, %v474
    %v481 = vmul.f32 %v480, %v479
    %v482 = vmul.f32 %v474, %v368
    %v483 = vadd.f32 %v481, %v482
    %484 = vst [vmem:[#allocation3 + $0x1] sm:$0x1] %v483
    %485 = vmatpush.msra.mxu0 %v244
    %486 = vmatpush.msra.mxu0 %v241
    %487 = vmatpush.msra.mxu0 %v238
    %488 = vmatpush.msra.mxu0 %v235
    %489 = vmatpush.msra.mxu0 %v232
    %490 = vmatpush.msra.mxu0 %v229
    %491 = vmatpush.msra.mxu0 %v226
    %492 = vmatpush.msra.mxu0 %v223
    %493 = vmatpush.msra.mxu0 %v220
    %494 = vmatpush.msra.mxu0 %v217
    %495 = vmatpush.msra.mxu0 %v214
    %496 = vmatpush.msra.mxu0 %v211
    %497 = vmatpush.msra.mxu0 %v208
    %498 = vmatpush.msra.mxu0 %v205
    %499 = vmatpush.msra.mxu0 %v202
    %500 = vmatpush.msra.mxu0 %v199
    %501 = vmatmul.f32.gmra.mxu0 %v483
    %v502 = vpop.f32.mrf.mxu0
    %v503 = vadd.f32 %v250, %v502
    %504 = vdwg.mxu0
    %505 = vmatpush.msra.mxu0 %v245
    %506 = vmatpush.msra.mxu0 %v242
    %507 = vmatpush.msra.mxu0 %v239
    %508 = vmatpush.msra.mxu0 %v236
    %509 = vmatpush.msra.mxu0 %v233
    %510 = vmatpush.msra.mxu0 %v230
    %511 = vmatpush.msra.mxu0 %v227
    %512 = vmatpush.msra.mxu0 %v224
    %513 = vmatpush.msra.mxu0 %v221
    %514 = vmatpush.msra.mxu0 %v218
    %515 = vmatpush.msra.mxu0 %v215
    %516 = vmatpush.msra.mxu0 %v212
    %517 = vmatpush.msra.mxu0 %v209
    %518 = vmatpush.msra.mxu0 %v206
    %519 = vmatpush.msra.mxu0 %v203
    %520 = vmatpush.msra.mxu0 %v200
    %521 = vmatmul.f32.gmra.mxu0 %v483
    %v522 = vpop.f32.mrf.mxu0
    %v523 = vadd.f32 %v251, %v522
    %524 = vdwg.mxu0
    %525 = vmatpush.msra.mxu0 %v246
    %526 = vmatpush.msra.mxu0 %v243
    %527 = vmatpush.msra.mxu0 %v240
    %528 = vmatpush.msra.mxu0 %v237
    %529 = vmatpush.msra.mxu0 %v234
    %530 = vmatpush.msra.mxu0 %v231
    %531 = vmatpush.msra.mxu0 %v228
    %532 = vmatpush.msra.mxu0 %v225
    %533 = vmatpush.msra.mxu0 %v222
    %534 = vmatpush.msra.mxu0 %v219
    %535 = vmatpush.msra.mxu0 %v216
    %536 = vmatpush.msra.mxu0 %v213
    %537 = vmatpush.msra.mxu0 %v210
    %538 = vmatpush.msra.mxu0 %v207
    %539 = vmatpush.msra.mxu0 %v204
    %540 = vmatpush.msra.mxu0 %v201
    %541 = vmatmul.f32.gmra.mxu0 %v483
    %v542 = vpop.f32.mrf.mxu0
    %v543 = vadd.f32 %v252, %v542
    %544 = vdwg.mxu0
    %s545 = scalar_lea.vmem [#allocation2], 2
    %v546 = vld [vmem:[%s545] ss:$8 sm:$0x7]
    %v547 = vadd.f32 %v546, %v503
    %v548 = vxor.u32 %v547, 2147483648
    %v549 = vmul.f32 %v548, 1.442695
    %v550 = vpow.pop %v549
    %v551 = vadd.f32 %v550, 1.0
    %v552 = vrcp.pop %v551
    %v553 = vmul.f32 %v551, %v552
    %v554 = vsub.f32 1.0, %v553
    %v555 = vmul.f32 %v552, %v554
    %v556 = vadd.f32 %v552, %v555
    %vm557 = vweird.f32 %v551
    %vm558 = vweird.f32 %v552
    %vm559 = vmor %vm557, %vm558
    %v560 = vsel %vm559, %v552, %v556
    %v561 = vand.u32 2147483647, %v551
    %vm562 = vcmp.eq.f32.partialorder %v561, 8.507059e+37
    %v563 = vand.u32 %v551, 2147483648
    %v564 = vor.u32 1.1754944e-38, %v563
    %v565 = vsel %vm562, %v564, %v560
    %v566 = vmul.f32 1.0, %v565
    %v568 = vrot.slane %v546, 1
    %v570 = vadd.f32 %v568, %v523
    %v571 = vxor.u32 %v570, 2147483648
    %v572 = vmul.f32 %v571, 1.442695
    %v573 = vpow.pop %v572
    %v574 = vadd.f32 %v573, 1.0
    %v575 = vrcp.pop %v574
    %v576 = vmul.f32 %v574, %v575
    %v577 = vsub.f32 1.0, %v576
    %v578 = vmul.f32 %v575, %v577
    %v579 = vadd.f32 %v575, %v578
    %vm580 = vweird.f32 %v574
    %vm581 = vweird.f32 %v575
    %vm582 = vmor %vm580, %vm581
    %v583 = vsel %vm582, %v575, %v579
    %v584 = vand.u32 2147483647, %v574
    %vm585 = vcmp.eq.f32.partialorder %v584, 8.507059e+37
    %v586 = vand.u32 %v574, 2147483648
    %v587 = vor.u32 1.1754944e-38, %v586
    %v588 = vsel %vm585, %v587, %v583
    %v589 = vmul.f32 1.0, %v588
    %v590 = vmul.f32 %v566, %v543
    %v591 = vrot.slane %v546, 2
    %v593 = vadd.f32 %v591, %v590
    %v594 = vtanh.pop %v593
    %v595 = vsub.f32 1.0, %v589
    %v596 = vmul.f32 %v595, %v594
    %v597 = vmul.f32 %v589, %v483
    %v598 = vadd.f32 %v596, %v597
    %599 = vst [vmem:[#allocation3 + $0x2] sm:$0x1] %v598
    %600 = vmatpush.msra.mxu0 %v244
    %601 = vmatpush.msra.mxu0 %v241
    %602 = vmatpush.msra.mxu0 %v238
    %603 = vmatpush.msra.mxu0 %v235
    %604 = vmatpush.msra.mxu0 %v232
    %605 = vmatpush.msra.mxu0 %v229
    %606 = vmatpush.msra.mxu0 %v226
    %607 = vmatpush.msra.mxu0 %v223
    %608 = vmatpush.msra.mxu0 %v220
    %609 = vmatpush.msra.mxu0 %v217
    %610 = vmatpush.msra.mxu0 %v214
    %611 = vmatpush.msra.mxu0 %v211
    %612 = vmatpush.msra.mxu0 %v208
    %613 = vmatpush.msra.mxu0 %v205
    %614 = vmatpush.msra.mxu0 %v202
    %615 = vmatpush.msra.mxu0 %v199
    %616 = vmatmul.f32.gmra.mxu0 %v598
    %v617 = vpop.f32.mrf.mxu0
    %v618 = vadd.f32 %v250, %v617
    %619 = vdwg.mxu0
    %620 = vmatpush.msra.mxu0 %v245
    %621 = vmatpush.msra.mxu0 %v242
    %622 = vmatpush.msra.mxu0 %v239
    %623 = vmatpush.msra.mxu0 %v236
    %624 = vmatpush.msra.mxu0 %v233
    %625 = vmatpush.msra.mxu0 %v230
    %626 = vmatpush.msra.mxu0 %v227
    %627 = vmatpush.msra.mxu0 %v224
    %628 = vmatpush.msra.mxu0 %v221
    %629 = vmatpush.msra.mxu0 %v218
    %630 = vmatpush.msra.mxu0 %v215
    %631 = vmatpush.msra.mxu0 %v212
    %632 = vmatpush.msra.mxu0 %v209
    %633 = vmatpush.msra.mxu0 %v206
    %634 = vmatpush.msra.mxu0 %v203
    %635 = vmatpush.msra.mxu0 %v200
    %636 = vmatmul.f32.gmra.mxu0 %v598
    %v637 = vpop.f32.mrf.mxu0
    %v638 = vadd.f32 %v251, %v637
    %639 = vdwg.mxu0
    %640 = vmatpush.msra.mxu0 %v246
    %641 = vmatpush.msra.mxu0 %v243
    %642 = vmatpush.msra.mxu0 %v240
    %643 = vmatpush.msra.mxu0 %v237
    %644 = vmatpush.msra.mxu0 %v234
    %645 = vmatpush.msra.mxu0 %v231
    %646 = vmatpush.msra.mxu0 %v228
    %647 = vmatpush.msra.mxu0 %v225
    %648 = vmatpush.msra.mxu0 %v222
    %649 = vmatpush.msra.mxu0 %v219
    %650 = vmatpush.msra.mxu0 %v216
    %651 = vmatpush.msra.mxu0 %v213
    %652 = vmatpush.msra.mxu0 %v210
    %653 = vmatpush.msra.mxu0 %v207
    %654 = vmatpush.msra.mxu0 %v204
    %655 = vmatpush.msra.mxu0 %v201
    %656 = vmatmul.f32.gmra.mxu0 %v598
    %v657 = vpop.f32.mrf.mxu0
    %v658 = vadd.f32 %v252, %v657
    %659 = vdwg.mxu0
    %s660 = scalar_lea.vmem [#allocation2], 3
    %v661 = vld [vmem:[%s660] ss:$8 sm:$0x7]
    %v662 = vadd.f32 %v661, %v618
    %v663 = vxor.u32 %v662, 2147483648
    %v664 = vmul.f32 %v663, 1.442695
    %v665 = vpow.pop %v664
    %v666 = vadd.f32 %v665, 1.0
    %v667 = vrcp.pop %v666
    %v668 = vmul.f32 %v666, %v667
    %v669 = vsub.f32 1.0, %v668
    %v670 = vmul.f32 %v667, %v669
    %v671 = vadd.f32 %v667, %v670
    %vm672 = vweird.f32 %v666
    %vm673 = vweird.f32 %v667
    %vm674 = vmor %vm672, %vm673
    %v675 = vsel %vm674, %v667, %v671
    %v676 = vand.u32 2147483647, %v666
    %vm677 = vcmp.eq.f32.partialorder %v676, 8.507059e+37
    %v678 = vand.u32 %v666, 2147483648
    %v679 = vor.u32 1.1754944e-38, %v678
    %v680 = vsel %vm677, %v679, %v675
    %v681 = vmul.f32 1.0, %v680
    %v683 = vrot.slane %v661, 1
    %v685 = vadd.f32 %v683, %v638
    %v686 = vxor.u32 %v685, 2147483648
    %v687 = vmul.f32 %v686, 1.442695
    %v688 = vpow.pop %v687
    %v689 = vadd.f32 %v688, 1.0
    %v690 = vrcp.pop %v689
    %v691 = vmul.f32 %v689, %v690
    %v692 = vsub.f32 1.0, %v691
    %v693 = vmul.f32 %v690, %v692
    %v694 = vadd.f32 %v690, %v693
    %vm695 = vweird.f32 %v689
    %vm696 = vweird.f32 %v690
    %vm697 = vmor %vm695, %vm696
    %v698 = vsel %vm697, %v690, %v694
    %v699 = vand.u32 2147483647, %v689
    %vm700 = vcmp.eq.f32.partialorder %v699, 8.507059e+37
    %v701 = vand.u32 %v689, 2147483648
    %v702 = vor.u32 1.1754944e-38, %v701
    %v703 = vsel %vm700, %v702, %v698
    %v704 = vmul.f32 1.0, %v703
    %v705 = vmul.f32 %v681, %v658
    %v706 = vrot.slane %v661, 2
    %v708 = vadd.f32 %v706, %v705
    %v709 = vtanh.pop %v708
    %v710 = vsub.f32 1.0, %v704
    %v711 = vmul.f32 %v710, %v709
    %v712 = vmul.f32 %v704, %v598
    %v713 = vadd.f32 %v711, %v712
    %714 = vst [vmem:[#allocation3 + $0x3] sm:$0x1] %v713
    %715 = vmatpush.msra.mxu0 %v244
    %716 = vmatpush.msra.mxu0 %v241
    %717 = vmatpush.msra.mxu0 %v238
    %718 = vmatpush.msra.mxu0 %v235
    %719 = vmatpush.msra.mxu0 %v232
    %720 = vmatpush.msra.mxu0 %v229
    %721 = vmatpush.msra.mxu0 %v226
    %722 = vmatpush.msra.mxu0 %v223
    %723 = vmatpush.msra.mxu0 %v220
    %724 = vmatpush.msra.mxu0 %v217
    %725 = vmatpush.msra.mxu0 %v214
    %726 = vmatpush.msra.mxu0 %v211
    %727 = vmatpush.msra.mxu0 %v208
    %728 = vmatpush.msra.mxu0 %v205
    %729 = vmatpush.msra.mxu0 %v202
    %730 = vmatpush.msra.mxu0 %v199
    %731 = vmatmul.f32.gmra.mxu0 %v713
    %v732 = vpop.f32.mrf.mxu0
    %v733 = vadd.f32 %v250, %v732
    %734 = vdwg.mxu0
    %735 = vmatpush.msra.mxu0 %v245
    %736 = vmatpush.msra.mxu0 %v242
    %737 = vmatpush.msra.mxu0 %v239
    %738 = vmatpush.msra.mxu0 %v236
    %739 = vmatpush.msra.mxu0 %v233
    %740 = vmatpush.msra.mxu0 %v230
    %741 = vmatpush.msra.mxu0 %v227
    %742 = vmatpush.msra.mxu0 %v224
    %743 = vmatpush.msra.mxu0 %v221
    %744 = vmatpush.msra.mxu0 %v218
    %745 = vmatpush.msra.mxu0 %v215
    %746 = vmatpush.msra.mxu0 %v212
    %747 = vmatpush.msra.mxu0 %v209
    %748 = vmatpush.msra.mxu0 %v206
    %749 = vmatpush.msra.mxu0 %v203
    %750 = vmatpush.msra.mxu0 %v200
    %751 = vmatmul.f32.gmra.mxu0 %v713
    %v752 = vpop.f32.mrf.mxu0
    %v753 = vadd.f32 %v251, %v752
    %754 = vdwg.mxu0
    %755 = vmatpush.msra.mxu0 %v246
    %756 = vmatpush.msra.mxu0 %v243
    %757 = vmatpush.msra.mxu0 %v240
    %758 = vmatpush.msra.mxu0 %v237
    %759 = vmatpush.msra.mxu0 %v234
    %760 = vmatpush.msra.mxu0 %v231
    %761 = vmatpush.msra.mxu0 %v228
    %762 = vmatpush.msra.mxu0 %v225
    %763 = vmatpush.msra.mxu0 %v222
    %764 = vmatpush.msra.mxu0 %v219
    %765 = vmatpush.msra.mxu0 %v216
    %766 = vmatpush.msra.mxu0 %v213
    %767 = vmatpush.msra.mxu0 %v210
    %768 = vmatpush.msra.mxu0 %v207
    %769 = vmatpush.msra.mxu0 %v204
    %770 = vmatpush.msra.mxu0 %v201
    %771 = vmatmul.f32.gmra.mxu0 %v713
    %v772 = vpop.f32.mrf.mxu0
    %v773 = vadd.f32 %v252, %v772
    %774 = vdwg.mxu0
    %s775 = scalar_lea.vmem [#allocation2], 4
    %v776 = vld [vmem:[%s775] ss:$8 sm:$0x7]
    %v777 = vadd.f32 %v776, %v733
    %v778 = vxor.u32 %v777, 2147483648
    %v779 = vmul.f32 %v778, 1.442695
    %v780 = vpow.pop %v779
    %v781 = vadd.f32 %v780, 1.0
    %v782 = vrcp.pop %v781
    %v783 = vmul.f32 %v781, %v782
    %v784 = vsub.f32 1.0, %v783
    %v785 = vmul.f32 %v782, %v784
    %v786 = vadd.f32 %v782, %v785
    %vm787 = vweird.f32 %v781
    %vm788 = vweird.f32 %v782
    %vm789 = vmor %vm787, %vm788
    %v790 = vsel %vm789, %v782, %v786
    %v791 = vand.u32 2147483647, %v781
    %vm792 = vcmp.eq.f32.partialorder %v791, 8.507059e+37
    %v793 = vand.u32 %v781, 2147483648
    %v794 = vor.u32 1.1754944e-38, %v793
    %v795 = vsel %vm792, %v794, %v790
    %v796 = vmul.f32 1.0, %v795
    %v798 = vrot.slane %v776, 1
    %v800 = vadd.f32 %v798, %v753
    %v801 = vxor.u32 %v800, 2147483648
    %v802 = vmul.f32 %v801, 1.442695
    %v803 = vpow.pop %v802
    %v804 = vadd.f32 %v803, 1.0
    %v805 = vrcp.pop %v804
    %v806 = vmul.f32 %v804, %v805
    %v807 = vsub.f32 1.0, %v806
    %v808 = vmul.f32 %v805, %v807
    %v809 = vadd.f32 %v805, %v808
    %vm810 = vweird.f32 %v804
    %vm811 = vweird.f32 %v805
    %vm812 = vmor %vm810, %vm811
    %v813 = vsel %vm812, %v805, %v809
    %v814 = vand.u32 2147483647, %v804
    %vm815 = vcmp.eq.f32.partialorder %v814, 8.507059e+37
    %v816 = vand.u32 %v804, 2147483648
    %v817 = vor.u32 1.1754944e-38, %v816
    %v818 = vsel %vm815, %v817, %v813
    %v819 = vmul.f32 1.0, %v818
    %v820 = vmul.f32 %v796, %v773
    %v821 = vrot.slane %v776, 2
    %v823 = vadd.f32 %v821, %v820
    %v824 = vtanh.pop %v823
    %v825 = vsub.f32 1.0, %v819
    %v826 = vmul.f32 %v825, %v824
    %v827 = vmul.f32 %v819, %v713
    %v828 = vadd.f32 %v826, %v827
    %829 = vst [vmem:[#allocation3 + $0x4] sm:$0x1] %v828
    %830 = vmatpush.msra.mxu0 %v244
    %831 = vmatpush.msra.mxu0 %v241
    %832 = vmatpush.msra.mxu0 %v238
    %833 = vmatpush.msra.mxu0 %v235
    %834 = vmatpush.msra.mxu0 %v232
    %835 = vmatpush.msra.mxu0 %v229
    %836 = vmatpush.msra.mxu0 %v226
    %837 = vmatpush.msra.mxu0 %v223
    %838 = vmatpush.msra.mxu0 %v220
    %839 = vmatpush.msra.mxu0 %v217
    %840 = vmatpush.msra.mxu0 %v214
    %841 = vmatpush.msra.mxu0 %v211
    %842 = vmatpush.msra.mxu0 %v208
    %843 = vmatpush.msra.mxu0 %v205
    %844 = vmatpush.msra.mxu0 %v202
    %845 = vmatpush.msra.mxu0 %v199
    %846 = vmatmul.f32.gmra.mxu0 %v828
    %v847 = vpop.f32.mrf.mxu0
    %v848 = vadd.f32 %v250, %v847
    %849 = vdwg.mxu0
    %850 = vmatpush.msra.mxu0 %v245
    %851 = vmatpush.msra.mxu0 %v242
    %852 = vmatpush.msra.mxu0 %v239
    %853 = vmatpush.msra.mxu0 %v236
    %854 = vmatpush.msra.mxu0 %v233
    %855 = vmatpush.msra.mxu0 %v230
    %856 = vmatpush.msra.mxu0 %v227
    %857 = vmatpush.msra.mxu0 %v224
    %858 = vmatpush.msra.mxu0 %v221
    %859 = vmatpush.msra.mxu0 %v218
    %860 = vmatpush.msra.mxu0 %v215
    %861 = vmatpush.msra.mxu0 %v212
    %862 = vmatpush.msra.mxu0 %v209
    %863 = vmatpush.msra.mxu0 %v206
    %864 = vmatpush.msra.mxu0 %v203
    %865 = vmatpush.msra.mxu0 %v200
    %866 = vmatmul.f32.gmra.mxu0 %v828
    %v867 = vpop.f32.mrf.mxu0
    %v868 = vadd.f32 %v251, %v867
    %869 = vdwg.mxu0
    %870 = vmatpush.msra.mxu0 %v246
    %871 = vmatpush.msra.mxu0 %v243
    %872 = vmatpush.msra.mxu0 %v240
    %873 = vmatpush.msra.mxu0 %v237
    %874 = vmatpush.msra.mxu0 %v234
    %875 = vmatpush.msra.mxu0 %v231
    %876 = vmatpush.msra.mxu0 %v228
    %877 = vmatpush.msra.mxu0 %v225
    %878 = vmatpush.msra.mxu0 %v222
    %879 = vmatpush.msra.mxu0 %v219
    %880 = vmatpush.msra.mxu0 %v216
    %881 = vmatpush.msra.mxu0 %v213
    %882 = vmatpush.msra.mxu0 %v210
    %883 = vmatpush.msra.mxu0 %v207
    %884 = vmatpush.msra.mxu0 %v204
    %885 = vmatpush.msra.mxu0 %v201
    %886 = vmatmul.f32.gmra.mxu0 %v828
    %v887 = vpop.f32.mrf.mxu0
    %v888 = vadd.f32 %v252, %v887
    %889 = vdwg.mxu0
    %s890 = scalar_lea.vmem [#allocation2], 5
    %v891 = vld [vmem:[%s890] ss:$8 sm:$0x7]
    %v892 = vadd.f32 %v891, %v848
    %v893 = vxor.u32 %v892, 2147483648
    %v894 = vmul.f32 %v893, 1.442695
    %v895 = vpow.pop %v894
    %v896 = vadd.f32 %v895, 1.0
    %v897 = vrcp.pop %v896
    %v898 = vmul.f32 %v896, %v897
    %v899 = vsub.f32 1.0, %v898
    %v900 = vmul.f32 %v897, %v899
    %v901 = vadd.f32 %v897, %v900
    %vm902 = vweird.f32 %v896
    %vm903 = vweird.f32 %v897
    %vm904 = vmor %vm902, %vm903
    %v905 = vsel %vm904, %v897, %v901
    %v906 = vand.u32 2147483647, %v896
    %vm907 = vcmp.eq.f32.partialorder %v906, 8.507059e+37
    %v908 = vand.u32 %v896, 2147483648
    %v909 = vor.u32 1.1754944e-38, %v908
    %v910 = vsel %vm907, %v909, %v905
    %v911 = vmul.f32 1.0, %v910
    %v913 = vrot.slane %v891, 1
    %v915 = vadd.f32 %v913, %v868
    %v916 = vxor.u32 %v915, 2147483648
    %v917 = vmul.f32 %v916, 1.442695
    %v918 = vpow.pop %v917
    %v919 = vadd.f32 %v918, 1.0
    %v920 = vrcp.pop %v919
    %v921 = vmul.f32 %v919, %v920
    %v922 = vsub.f32 1.0, %v921
    %v923 = vmul.f32 %v920, %v922
    %v924 = vadd.f32 %v920, %v923
    %vm925 = vweird.f32 %v919
    %vm926 = vweird.f32 %v920
    %vm927 = vmor %vm925, %vm926
    %v928 = vsel %vm927, %v920, %v924
    %v929 = vand.u32 2147483647, %v919
    %vm930 = vcmp.eq.f32.partialorder %v929, 8.507059e+37
    %v931 = vand.u32 %v919, 2147483648
    %v932 = vor.u32 1.1754944e-38, %v931
    %v933 = vsel %vm930, %v932, %v928
    %v934 = vmul.f32 1.0, %v933
    %v935 = vmul.f32 %v911, %v888
    %v936 = vrot.slane %v891, 2
    %v938 = vadd.f32 %v936, %v935
    %v939 = vtanh.pop %v938
    %v940 = vsub.f32 1.0, %v934
    %v941 = vmul.f32 %v940, %v939
    %v942 = vmul.f32 %v934, %v828
    %v943 = vadd.f32 %v941, %v942
    %944 = vst [vmem:[#allocation3 + $0x5] sm:$0x1] %v943
    %945 = vmatpush.msra.mxu0 %v244
    %946 = vmatpush.msra.mxu0 %v241
    %947 = vmatpush.msra.mxu0 %v238
    %948 = vmatpush.msra.mxu0 %v235
    %949 = vmatpush.msra.mxu0 %v232
    %950 = vmatpush.msra.mxu0 %v229
    %951 = vmatpush.msra.mxu0 %v226
    %952 = vmatpush.msra.mxu0 %v223
    %953 = vmatpush.msra.mxu0 %v220
    %954 = vmatpush.msra.mxu0 %v217
    %955 = vmatpush.msra.mxu0 %v214
    %956 = vmatpush.msra.mxu0 %v211
    %957 = vmatpush.msra.mxu0 %v208
    %958 = vmatpush.msra.mxu0 %v205
    %959 = vmatpush.msra.mxu0 %v202
    %960 = vmatpush.msra.mxu0 %v199
    %961 = vmatmul.f32.gmra.mxu0 %v943
    %v962 = vpop.f32.mrf.mxu0
    %v963 = vadd.f32 %v250, %v962
    %964 = vdwg.mxu0
    %965 = vmatpush.msra.mxu0 %v245
    %966 = vmatpush.msra.mxu0 %v242
    %967 = vmatpush.msra.mxu0 %v239
    %968 = vmatpush.msra.mxu0 %v236
    %969 = vmatpush.msra.mxu0 %v233
    %970 = vmatpush.msra.mxu0 %v230
    %971 = vmatpush.msra.mxu0 %v227
    %972 = vmatpush.msra.mxu0 %v224
    %973 = vmatpush.msra.mxu0 %v221
    %974 = vmatpush.msra.mxu0 %v218
    %975 = vmatpush.msra.mxu0 %v215
    %976 = vmatpush.msra.mxu0 %v212
    %977 = vmatpush.msra.mxu0 %v209
    %978 = vmatpush.msra.mxu0 %v206
    %979 = vmatpush.msra.mxu0 %v203
    %980 = vmatpush.msra.mxu0 %v200
    %981 = vmatmul.f32.gmra.mxu0 %v943
    %v982 = vpop.f32.mrf.mxu0
    %v983 = vadd.f32 %v251, %v982
    %984 = vdwg.mxu0
    %985 = vmatpush.msra.mxu0 %v246
    %986 = vmatpush.msra.mxu0 %v243
    %987 = vmatpush.msra.mxu0 %v240
    %988 = vmatpush.msra.mxu0 %v237
    %989 = vmatpush.msra.mxu0 %v234
    %990 = vmatpush.msra.mxu0 %v231
    %991 = vmatpush.msra.mxu0 %v228
    %992 = vmatpush.msra.mxu0 %v225
    %993 = vmatpush.msra.mxu0 %v222
    %994 = vmatpush.msra.mxu0 %v219
    %995 = vmatpush.msra.mxu0 %v216
    %996 = vmatpush.msra.mxu0 %v213
    %997 = vmatpush.msra.mxu0 %v210
    %998 = vmatpush.msra.mxu0 %v207
    %999 = vmatpush.msra.mxu0 %v204
    %1000 = vmatpush.msra.mxu0 %v201
    %1001 = vmatmul.f32.gmra.mxu0 %v943
    %v1002 = vpop.f32.mrf.mxu0
    %v1003 = vadd.f32 %v252, %v1002
    %1004 = vdwg.mxu0
    %s1005 = scalar_lea.vmem [#allocation2], 6
    %v1006 = vld [vmem:[%s1005] ss:$8 sm:$0x7]
    %v1007 = vadd.f32 %v1006, %v963
    %v1008 = vxor.u32 %v1007, 2147483648
    %v1009 = vmul.f32 %v1008, 1.442695
    %v1010 = vpow.pop %v1009
    %v1011 = vadd.f32 %v1010, 1.0
    %v1012 = vrcp.pop %v1011
    %v1013 = vmul.f32 %v1011, %v1012
    %v1014 = vsub.f32 1.0, %v1013
    %v1015 = vmul.f32 %v1012, %v1014
    %v1016 = vadd.f32 %v1012, %v1015
    %vm1017 = vweird.f32 %v1011
    %vm1018 = vweird.f32 %v1012
    %vm1019 = vmor %vm1017, %vm1018
    %v1020 = vsel %vm1019, %v1012, %v1016
    %v1021 = vand.u32 2147483647, %v1011
    %vm1022 = vcmp.eq.f32.partialorder %v1021, 8.507059e+37
    %v1023 = vand.u32 %v1011, 2147483648
    %v1024 = vor.u32 1.1754944e-38, %v1023
    %v1025 = vsel %vm1022, %v1024, %v1020
    %v1026 = vmul.f32 1.0, %v1025
    %v1028 = vrot.slane %v1006, 1
    %v1030 = vadd.f32 %v1028, %v983
    %v1031 = vxor.u32 %v1030, 2147483648
    %v1032 = vmul.f32 %v1031, 1.442695
    %v1033 = vpow.pop %v1032
    %v1034 = vadd.f32 %v1033, 1.0
    %v1035 = vrcp.pop %v1034
    %v1036 = vmul.f32 %v1034, %v1035
    %v1037 = vsub.f32 1.0, %v1036
    %v1038 = vmul.f32 %v1035, %v1037
    %v1039 = vadd.f32 %v1035, %v1038
    %vm1040 = vweird.f32 %v1034
    %vm1041 = vweird.f32 %v1035
    %vm1042 = vmor %vm1040, %vm1041
    %v1043 = vsel %vm1042, %v1035, %v1039
    %v1044 = vand.u32 2147483647, %v1034
    %vm1045 = vcmp.eq.f32.partialorder %v1044, 8.507059e+37
    %v1046 = vand.u32 %v1034, 2147483648
    %v1047 = vor.u32 1.1754944e-38, %v1046
    %v1048 = vsel %vm1045, %v1047, %v1043
    %v1049 = vmul.f32 1.0, %v1048
    %v1050 = vmul.f32 %v1026, %v1003
    %v1051 = vrot.slane %v1006, 2
    %v1053 = vadd.f32 %v1051, %v1050
    %v1054 = vtanh.pop %v1053
    %v1055 = vsub.f32 1.0, %v1049
    %v1056 = vmul.f32 %v1055, %v1054
    %v1057 = vmul.f32 %v1049, %v943
    %v1058 = vadd.f32 %v1056, %v1057
    %1059 = vst [vmem:[#allocation3 + $0x6] sm:$0x1] %v1058
    %1060 = vmatpush.msra.mxu0 %v244
    %1061 = vmatpush.msra.mxu0 %v241
    %1062 = vmatpush.msra.mxu0 %v238
    %1063 = vmatpush.msra.mxu0 %v235
    %1064 = vmatpush.msra.mxu0 %v232
    %1065 = vmatpush.msra.mxu0 %v229
    %1066 = vmatpush.msra.mxu0 %v226
    %1067 = vmatpush.msra.mxu0 %v223
    %1068 = vmatpush.msra.mxu0 %v220
    %1069 = vmatpush.msra.mxu0 %v217
    %1070 = vmatpush.msra.mxu0 %v214
    %1071 = vmatpush.msra.mxu0 %v211
    %1072 = vmatpush.msra.mxu0 %v208
    %1073 = vmatpush.msra.mxu0 %v205
    %1074 = vmatpush.msra.mxu0 %v202
    %1075 = vmatpush.msra.mxu0 %v199
    %1076 = vmatmul.f32.gmra.mxu0 %v1058
    %v1077 = vpop.f32.mrf.mxu0
    %v1078 = vadd.f32 %v250, %v1077
    %1079 = vdwg.mxu0
    %1080 = vmatpush.msra.mxu0 %v245
    %1081 = vmatpush.msra.mxu0 %v242
    %1082 = vmatpush.msra.mxu0 %v239
    %1083 = vmatpush.msra.mxu0 %v236
    %1084 = vmatpush.msra.mxu0 %v233
    %1085 = vmatpush.msra.mxu0 %v230
    %1086 = vmatpush.msra.mxu0 %v227
    %1087 = vmatpush.msra.mxu0 %v224
    %1088 = vmatpush.msra.mxu0 %v221
    %1089 = vmatpush.msra.mxu0 %v218
    %1090 = vmatpush.msra.mxu0 %v215
    %1091 = vmatpush.msra.mxu0 %v212
    %1092 = vmatpush.msra.mxu0 %v209
    %1093 = vmatpush.msra.mxu0 %v206
    %1094 = vmatpush.msra.mxu0 %v203
    %1095 = vmatpush.msra.mxu0 %v200
    %1096 = vmatmul.f32.gmra.mxu0 %v1058
    %v1097 = vpop.f32.mrf.mxu0
    %v1098 = vadd.f32 %v251, %v1097
    %1099 = vdwg.mxu0
    %1100 = vmatpush.msra.mxu0 %v246
    %1101 = vmatpush.msra.mxu0 %v243
    %1102 = vmatpush.msra.mxu0 %v240
    %1103 = vmatpush.msra.mxu0 %v237
    %1104 = vmatpush.msra.mxu0 %v234
    %1105 = vmatpush.msra.mxu0 %v231
    %1106 = vmatpush.msra.mxu0 %v228
    %1107 = vmatpush.msra.mxu0 %v225
    %1108 = vmatpush.msra.mxu0 %v222
    %1109 = vmatpush.msra.mxu0 %v219
    %1110 = vmatpush.msra.mxu0 %v216
    %1111 = vmatpush.msra.mxu0 %v213
    %1112 = vmatpush.msra.mxu0 %v210
    %1113 = vmatpush.msra.mxu0 %v207
    %1114 = vmatpush.msra.mxu0 %v204
    %1115 = vmatpush.msra.mxu0 %v201
    %1116 = vmatmul.f32.gmra.mxu0 %v1058
    %v1117 = vpop.f32.mrf.mxu0
    %v1118 = vadd.f32 %v252, %v1117
    %1119 = vdwg.mxu0
    %s1120 = scalar_lea.vmem [#allocation2], 7
    %v1121 = vld [vmem:[%s1120] ss:$8 sm:$0x7]
    %v1122 = vadd.f32 %v1121, %v1078
    %v1123 = vxor.u32 %v1122, 2147483648
    %v1124 = vmul.f32 %v1123, 1.442695
    %v1125 = vpow.pop %v1124
    %v1126 = vadd.f32 %v1125, 1.0
    %v1127 = vrcp.pop %v1126
    %v1128 = vmul.f32 %v1126, %v1127
    %v1129 = vsub.f32 1.0, %v1128
    %v1130 = vmul.f32 %v1127, %v1129
    %v1131 = vadd.f32 %v1127, %v1130
    %vm1132 = vweird.f32 %v1126
    %vm1133 = vweird.f32 %v1127
    %vm1134 = vmor %vm1132, %vm1133
    %v1135 = vsel %vm1134, %v1127, %v1131
    %v1136 = vand.u32 2147483647, %v1126
    %vm1137 = vcmp.eq.f32.partialorder %v1136, 8.507059e+37
    %v1138 = vand.u32 %v1126, 2147483648
    %v1139 = vor.u32 1.1754944e-38, %v1138
    %v1140 = vsel %vm1137, %v1139, %v1135
    %v1141 = vmul.f32 1.0, %v1140
    %v1143 = vrot.slane %v1121, 1
    %v1145 = vadd.f32 %v1143, %v1098
    %v1146 = vxor.u32 %v1145, 2147483648
    %v1147 = vmul.f32 %v1146, 1.442695
    %v1148 = vpow.pop %v1147
    %v1149 = vadd.f32 %v1148, 1.0
    %v1150 = vrcp.pop %v1149
    %v1151 = vmul.f32 %v1149, %v1150
    %v1152 = vsub.f32 1.0, %v1151
    %v1153 = vmul.f32 %v1150, %v1152
    %v1154 = vadd.f32 %v1150, %v1153
    %vm1155 = vweird.f32 %v1149
    %vm1156 = vweird.f32 %v1150
    %vm1157 = vmor %vm1155, %vm1156
    %v1158 = vsel %vm1157, %v1150, %v1154
    %v1159 = vand.u32 2147483647, %v1149
    %vm1160 = vcmp.eq.f32.partialorder %v1159, 8.507059e+37
    %v1161 = vand.u32 %v1149, 2147483648
    %v1162 = vor.u32 1.1754944e-38, %v1161
    %v1163 = vsel %vm1160, %v1162, %v1158
    %v1164 = vmul.f32 1.0, %v1163
    %v1165 = vmul.f32 %v1141, %v1118
    %v1166 = vrot.slane %v1121, 2
    %v1168 = vadd.f32 %v1166, %v1165
    %v1169 = vtanh.pop %v1168
    %v1170 = vsub.f32 1.0, %v1164
    %v1171 = vmul.f32 %v1170, %v1169
    %v1172 = vmul.f32 %v1164, %v1058
    %v1173 = vadd.f32 %v1171, %v1172
    %1174 = vst [vmem:[#allocation3 + $0x7] sm:$0x1] %v1173
    %v1175 = vld [vmem:[#allocation3] sm:$0xff]
    %v1176 = vld [vmem:[%s6] sm:$0xff]
    %v1177 = vld [vmem:[%s6 + $0x8] sm:$0xff]
    %v1178 = vld [vmem:[%s6 + $0x10] sm:$0xff]
    %v1179 = vld [vmem:[%s6 + $0x18] sm:$0xff]
    %v1180 = vld [vmem:[%s6 + $0x20] sm:$0xff]
    %v1181 = vld [vmem:[%s6 + $0x28] sm:$0xff]
    %v1182 = vld [vmem:[%s6 + $0x30] sm:$0xff]
    %v1183 = vld [vmem:[%s6 + $0x38] sm:$0xff]
    %v1184 = vld [vmem:[%s6 + $0x40] sm:$0xff]
    %v1185 = vld [vmem:[%s6 + $0x48] sm:$0xff]
    %v1186 = vld [vmem:[%s6 + $0x50] sm:$0xff]
    %v1187 = vld [vmem:[%s6 + $0x58] sm:$0xff]
    %v1188 = vld [vmem:[%s6 + $0x60] sm:$0xff]
    %v1189 = vld [vmem:[%s6 + $0x68] sm:$0xff]
    %v1190 = vld [vmem:[%s6 + $0x70] sm:$0xff]
    %v1191 = vld [vmem:[%s6 + $0x78] sm:$0xff]
    %v1192 = vld [vmem:[%s7] sm:$0x1]
    %v1194 = vperm.slane %v1192, 0
    %1196 = vmatpush.msra.mxu0 %v1191
    %1197 = vmatpush.msra.mxu0 %v1190
    %1198 = vmatpush.msra.mxu0 %v1189
    %1199 = vmatpush.msra.mxu0 %v1188
    %1200 = vmatpush.msra.mxu0 %v1187
    %1201 = vmatpush.msra.mxu0 %v1186
    %1202 = vmatpush.msra.mxu0 %v1185
    %1203 = vmatpush.msra.mxu0 %v1184
    %1204 = vmatpush.msra.mxu0 %v1183
    %1205 = vmatpush.msra.mxu0 %v1182
    %1206 = vmatpush.msra.mxu0 %v1181
    %1207 = vmatpush.msra.mxu0 %v1180
    %1208 = vmatpush.msra.mxu0 %v1179
    %1209 = vmatpush.msra.mxu0 %v1178
    %1210 = vmatpush.msra.mxu0 %v1177
    %1211 = vmatpush.msra.mxu0 %v1176
    %1212 = vmatmul.f32.gmra.mxu0 %v1175
    %v1213 = vpop.f32.mrf.mxu0
    %v1214 = vadd.f32 %v1194, %v1213
    %1215 = vdwg.mxu0
    %1216 = vst [vmem:[#allocation4] sm:$0xff] %v1214
    %1217 = vst [vmem:[%s10] sm:$0x1] %v1173
    // Predicated region
    $region38: #{rnn_forward_sequence.1} parent=1 // pred_check
      _
    $region39: #{rnn_forward_sequence.1} parent=1 // pred_check_branch
      %1219 = sbr.rel (0) target = $region41
    $region40: #{rnn_forward_sequence.1} parent=1 // pred_region
      %1221 = vsyncadd [#allocation5], 0
      %s1223 = sshll.u32 [#allocation4], 4
      %s1224 = int_to_ptr.vmem [resolvable:$true] %s1223
      %s1225 = sshll.u32 %s9, 4
      %s1226 = int_to_ptr.hbm [resolvable:$true] %s1225
      %1228 = dma.vmem_to_hbm [thread:$0]  %s1224, 128, %s1226, [#allocation5]
    $region41: #{rnn_forward_sequence.1} parent=1 // pred_fallthru
      _
    // Predicated region
    $region42: #{rnn_forward_sequence.1} parent=1 // pred_check
      _
    $region43: #{rnn_forward_sequence.1} parent=1 // pred_check_branch
      %1230 = sbr.rel (0) target = $region45
    $region44: #{rnn_forward_sequence.1} parent=1 // pred_region
      _
    $region45: #{rnn_forward_sequence.1} parent=1 // pred_fallthru
      _
    // Predicated region
    $region46: #{rnn_forward_sequence.1} parent=1 // pred_check
      _
    $region47: #{rnn_forward_sequence.1} parent=1 // pred_check_branch
      %1232 = sbr.rel (0) target = $region49
    $region48: #{rnn_forward_sequence.1} parent=1 // pred_region
      %1234 = dma.done [#allocation5], 128
    $region49: #{rnn_forward_sequence.1} parent=1 // pred_fallthru
      _
    // Predicated region
    $region50: #{rnn_forward_sequence.1} parent=1 // pred_check
      _
    $region51: #{rnn_forward_sequence.1} parent=1 // pred_check_branch
      %1236 = sbr.rel (0) target = $region53
    $region52: #{rnn_forward_sequence.1} parent=1 // pred_region
      _
    $region53: #{rnn_forward_sequence.1} parent=1 // pred_fallthru
      _
    %1237 = vsyncpa [#allocation5], 1

</llo_original>
